<compile_context>
chip_gen: v7x
topology: tpu7x:2x2x1
jax: 0.10.0
libtpu: 0.0.40
codegen_flags: <defaults>
</compile_context>

<pallas_src>
import math
import functools

import numpy as np
import jax
import jax.numpy as jnp
from jax.experimental import pallas as pl
from jax.experimental.pallas import tpu as pltpu


class SequenceTooLongError(Exception):
    pass


def build_pe(max_len, dim):
    """Deterministic sinusoidal table, identical to the PyTorch __init__ buffer."""
    if dim % 2 != 0:
        raise ValueError(f"Cannot use sin/cos positional encoding with odd dim (got dim={dim})")
    position = np.arange(max_len, dtype=np.float32)[:, None]
    div_term = np.exp(np.arange(0, dim, 2, dtype=np.float32) * -(math.log(10000.0) / dim))
    pe = np.zeros((max_len, dim), dtype=np.float32)
    pe[:, 0::2] = np.sin(position * div_term)
    pe[:, 1::2] = np.cos(position * div_term)
    return jnp.asarray(pe)


def check_sequence_length(position_mask, max_len):
    """Host-side validation (call OUTSIDE jit).  Mirrors the PyTorch forward's check
    without forcing a device->host sync inside the jitted hot path."""
    seq_len = np.asarray(jax.device_get(jnp.sum(position_mask.astype(jnp.int32), axis=(0, 1))))
    if seq_len.size and int(seq_len.max()) > max_len:
        raise SequenceTooLongError(
            "Sequence length {:d} exceeds max_len {:d}".format(int(seq_len.max()), max_len))


def _pos_encoding_kernel(emb_ref, idx_ref, pe_ref, out_ref, *, scale, gather_chunk):
    # emb_ref: [TN, D]   idx_ref: [TN, 1] int32 (-1 => no positional add)   pe_ref: [max_len, D]
    emb = emb_ref[...].astype(jnp.float32)
    idx = idx_ref[...]                                     # [TN, 1]
    tn, d = emb.shape
    max_len = pe_ref.shape[0]

    # Exact row gather of pe via one-hot matmul on the MXU (single 0/1 per row; idx=-1
    # rows gather the zero vector).  Chunked over max_len so the one-hot intermediate
    # stays <= tn*gather_chunk*4 bytes.  For very large max_len, consider jnp.take on
    # the VMEM ref or in-kernel sin/cos (EUP) instead.
    if max_len <= gather_chunk:
        iota = jax.lax.broadcasted_iota(jnp.int32, (tn, max_len), 1)
        one_hot = (iota == idx).astype(jnp.float32)
        gathered = jnp.dot(one_hot, pe_ref[...].astype(jnp.float32),
                           preferred_element_type=jnp.float32)
    else:
        gathered = jnp.zeros((tn, d), jnp.float32)
        for c0 in range(0, max_len, gather_chunk):
            csz = min(gather_chunk, max_len - c0)
            iota = jax.lax.broadcasted_iota(jnp.int32, (tn, csz), 1) + c0
            one_hot = (iota == idx).astype(jnp.float32)
            gathered = gathered + jnp.dot(one_hot, pe_ref[c0:c0 + csz, :].astype(jnp.float32),
                                          preferred_element_type=jnp.float32)

    out_ref[...] = (emb * scale + gathered).astype(out_ref.dtype)


def segment_position_encoding(emb, position_mask, pe, *, tile_n=512, gather_chunk=512,
                              vmem_limit_bytes=None, interpret=False):
    """emb: [S, L, B, D], position_mask: [S, L, B] bool, pe: [max_len, D].  jit-friendly."""
    S, L, B, D = emb.shape
    max_len = pe.shape[0]
    N = S * L * B
    scale = math.sqrt(D)

    # ---- index bookkeeping (plain JAX glue; reproduces the reference's per-batch
    #      concatenation + row-major boolean-mask scan order exactly) -------------------
    m_flat = position_mask.reshape(-1)                                   # (s, l, b) order
    seq_len = jnp.sum(position_mask.astype(jnp.int32), axis=(0, 1))      # [B]
    rank = jnp.cumsum(m_flat.astype(jnp.int32)) - 1                      # rank among True slots
    cs = jnp.cumsum(seq_len)                                             # [B]
    batch_of = jnp.searchsorted(cs, rank, side="right")
    cum_before = jnp.concatenate([jnp.zeros((1,), jnp.int32), cs[:-1]])
    # Fold the mask into the index: -1 => one-hot row is all-zero => no positional add.
    idx = jnp.where(m_flat, rank - cum_before[batch_of], -1).astype(jnp.int32)

    # ---- tile selection + VMEM budget (binding constraint: v7x 64 MiB physical) -------
    round_up_n = ((N + 7) // 8) * 8
    tile_n = max(8, (min(tile_n, round_up_n) // 8) * 8)

    pe_bytes = 2 * max_len * D * 4                 # constant-index block: 2 VMEM buffers
    def tile_bytes(tn):
        return (2 * 2 * tn * D * 4                 # emb in + out tiles, double-buffered
                + 2 * tn * 128 * 4                 # idx tiles (lane-padded to 128), 2 buffers
                + tn * min(gather_chunk, max_len) * 4   # one-hot chunk intermediate
                + 2 * tn * D * 4)                  # gathered accumulator + headroom
    budget = 40 * 1024 * 1024
    tile_budget = max(budget - pe_bytes, 8 * 1024 * 1024)
    while tile_n > 8 and tile_bytes(tile_n) > tile_budget:
        tile_n = max(8, ((tile_n // 2) // 8) * 8)

    if vmem_limit_bytes is None:
        # Raise above v5e's 16 MiB scoped default; stay <= v7x's 64 MiB physical VMEM.
        vmem_limit_bytes = int(min(64 << 20, max(48 << 20, pe_bytes + tile_bytes(tile_n) + (8 << 20))))

    # ---- kernel launch: no pad, no output slice (free reshapes only) ------------------
    emb_flat = emb.reshape(N, D)
    idx_col = idx.reshape(N, 1)
    grid = (pl.cdiv(N, tile_n),)                   # ragged tail handled by edge-block masking

    kernel = functools.partial(_pos_encoding_kernel, scale=scale, gather_chunk=gather_chunk)
    out = pl.pallas_call(
        kernel,
        out_shape=jax.ShapeDtypeStruct((N, D), emb.dtype),
        grid=grid,
        in_specs=[
            pl.BlockSpec((tile_n, D), lambda i: (i, 0)),       # emb rows (lane-dense in D)
            pl.BlockSpec((tile_n, 1), lambda i: (i, 0)),       # pe row index (-1 => skip)
            pl.BlockSpec((max_len, D), lambda i: (0, 0)),      # full pe table, DMA'd once
        ],
        out_specs=pl.BlockSpec((tile_n, D), lambda i: (i, 0)),
        compiler_params=pltpu.CompilerParams(
            dimension_semantics=("parallel",),                 # shards grid across v7x's 2 TCs
            vmem_limit_bytes=vmem_limit_bytes,
        ),
        interpret=interpret,
    )(emb_flat, idx_col, pe)

    # Dropout: identity (eval mode).
    return out.reshape(S, L, B, D)


def _numpy_reference(emb, position_mask, pe, dim):
    """Direct transcription of the PyTorch forward (dropout in eval mode)."""
    emb = np.asarray(emb) * math.sqrt(dim)
    mask = np.asarray(position_mask)
    pe = np.asarray(pe)
    S, L, B, D = emb.shape
    seq_len = mask.sum(axis=(0, 1))
    pos_emb = np.concatenate([pe[: int(seq_len[b])] for b in range(B)], axis=0) \
        if mask.any() else np.zeros((0, D), np.float32)
    flat = emb.reshape(-1, D).copy()
    sel = mask.reshape(-1)
    flat[sel] = flat[sel] + pos_emb
    return flat.reshape(S, L, B, D)


if __name__ == "__main__":
    key = jax.random.PRNGKey(0)
    # Small but non-trivial: N = S*L*B = 960 rows -> grid of 2 with a ragged last block,
    # D = 128 so the output is lane-dense.
    S, L, B, D = 10, 16, 6, 128
    max_len = 192

    k1, k2 = jax.random.split(key)
    emb = jax.random.normal(k1, (S, L, B, D), dtype=jnp.float32)
    position_mask = jax.random.bernoulli(k2, 0.6, (S, L, B))
    pe = build_pe(max_len, D)

    # Host-side length check (outside the jitted path, preserving module semantics).
    check_sequence_length(position_mask, max_len)

    fn = jax.jit(segment_position_encoding)
    out = fn(emb, position_mask, pe)
    out = jax.block_until_ready(out)

    ref = _numpy_reference(emb, position_mask, pe, D)
    np.testing.assert_allclose(np.asarray(out), ref, rtol=1e-5, atol=1e-5)

    print("KERNEL_OK")
</pallas_src>

<mosaic_0001>
module attributes {stable_mosaic.version = 11 : i64} {
  func.func @_pos_encoding_kernel(%arg0: i32, %arg1: memref<512x128xf32, #tpu.memory_space<vmem>>, %arg2: memref<512x1xi32, #tpu.memory_space<vmem>>, %arg3: memref<192x128xf32, #tpu.memory_space<vmem>>, %arg4: memref<512x128xf32, #tpu.memory_space<vmem>>) attributes {dimension_semantics = [#tpu.dimension_semantics<parallel>], iteration_bounds = array<i64: 2>, scalar_prefetch = 0 : i64, scratch_operands = 0 : i64, tpu.core_type = #tpu.core_type<tc>, window_params = [{transform_indices = @transform_0, window_bounds = array<i64: 512, 128>}, {transform_indices = @transform_1, window_bounds = array<i64: 512, 1>}, {pipeline_mode = #tpu.pipeline_mode<synchronous>, transform_indices = @transform_2, window_bounds = array<i64: 192, 128>}, {transform_indices = @transform_3, window_bounds = array<i64: 512, 128>}]} {
    %c0 = arith.constant 0 : index
    %c0_0 = arith.constant 0 : index
    %0 = vector.load %arg1[%c0, %c0_0] : memref<512x128xf32, #tpu.memory_space<vmem>>, vector<512x128xf32>
    %c0_1 = arith.constant 0 : index
    %c0_2 = arith.constant 0 : index
    %1 = vector.load %arg2[%c0_1, %c0_2] : memref<512x1xi32, #tpu.memory_space<vmem>>, vector<512x1xi32>
    %2 = tpu.iota {dimensions = array<i32: 1>} : vector<512x192xi32>
    %3 = vector.broadcast %1 : vector<512x1xi32> to vector<512x192xi32>
    %4 = arith.cmpi eq, %2, %3 : vector<512x192xi32>
    %5 = arith.extui %4 : vector<512x192xi1> to vector<512x192xi32>
    %6 = arith.sitofp %5 : vector<512x192xi32> to vector<512x192xf32>
    %c0_3 = arith.constant 0 : index
    %c0_4 = arith.constant 0 : index
    %7 = vector.load %arg3[%c0_3, %c0_4] : memref<192x128xf32, #tpu.memory_space<vmem>>, vector<192x128xf32>
    %cst = arith.constant dense<0.000000e+00> : vector<512x128xf32>
    %8 = tpu.matmul %6, %7, %cst {dimension_numbers = #tpu.dot_dimension_numbers<[1], [0], [0], [1], [0, 0, 1, 1], [], []>} : vector<512x192xf32>, vector<192x128xf32>, vector<512x128xf32> -> vector<512x128xf32>
    %cst_5 = arith.constant 11.3137083 : f32
    %9 = vector.broadcast %cst_5 : f32 to vector<512x128xf32>
    %10 = arith.mulf %0, %9 : vector<512x128xf32>
    %11 = arith.addf %10, %8 : vector<512x128xf32>
    %c0_6 = arith.constant 0 : index
    %c0_7 = arith.constant 0 : index
    %12 = vector.load %arg4[%c0_6, %c0_7] : memref<512x128xf32, #tpu.memory_space<vmem>>, vector<512x128xf32>
    tpu.vector_store %arg4[%c0_6, %c0_7], %11 {strides = array<i32>} : memref<512x128xf32, #tpu.memory_space<vmem>>, vector<512x128xf32>,
    return
  }
  func.func @transform_0(%arg0: i32) -> (i32, i32) {
    %c0_i32 = arith.constant 0 : i32
    %c0_i32_0 = arith.constant 0 : i32
    return %arg0, %c0_i32 : i32, i32
  }
  func.func @transform_1(%arg0: i32) -> (i32, i32) {
    %c0_i32 = arith.constant 0 : i32
    %c0_i32_0 = arith.constant 0 : i32
    return %arg0, %c0_i32 : i32, i32
  }
  func.func @transform_2(%arg0: i32) -> (i32, i32) {
    %c0_i32 = arith.constant 0 : i32
    %c0_i32_0 = arith.constant 0 : i32
    %c0_i32_1 = arith.constant 0 : i32
    return %c0_i32, %c0_i32_0 : i32, i32
  }
  func.func @transform_3(%arg0: i32) -> (i32, i32) {
    %c0_i32 = arith.constant 0 : i32
    %c0_i32_0 = arith.constant 0 : i32
    return %arg0, %c0_i32 : i32, i32
  }
}

</mosaic_0001>

<llo_original>
// kernel: custom-call
$region0: #{custom-call}
  %s0 = inlined_call_operand.vmem [shape: u32[960], index: 0, kind: output, shape index: {}]

// kernel: segment_position_encoding.1
$region0: #{segment_position_encoding.1}
  #allocation0 [shape = 'u32[]', space=smem, size = 0x4, offset = 0x4, fixed_abs, tag = 'smem constant byte address 0x4 - core index']
  #allocation1 [shape = 'u32[144,128]{1,0:T(1,128)}', space=vmem, size = 0x12000, scoped, tag = 'internal scratch']
  %s0 = inlined_call_operand.vmem [shape: f32[960,128], index: 0, kind: input, shape index: {}]
  %s1 = inlined_call_operand.vmem [shape: s32[960,1], index: 1, kind: input, shape index: {}]
  %s2 = inlined_call_operand.vmem [shape: f32[192,128], index: 2, kind: input, shape index: {}]
  %s3 = inlined_call_operand.vmem [shape: f32[960,128], index: 3, kind: output, shape index: {}]
  %s4 = sld [smem:[#allocation0]]
  $region93: #{segment_position_encoding.1} parent=0
    _
  %s6 = ssub.s32 1, %s4
  %s7 = scalar_select 0, %s6, %s4
  $region1: #{segment_position_encoding.1} parent=0
    #allocation2 [shape = 'u8[524288]{0}', space=vmem, size = 0x80000, scoped, tag = 'output window, operand 0']
    loop: start=0, step=1, limit=4
    $region2: #{segment_position_encoding.1} parent=1 // loop_pre_header
      _
    $region3: #{segment_position_encoding.1} parent=1 // loop_header
      %s9 = sphi 0, %s13
      %p10 = scmp.ge.s32.totalorder %s9, 4
      %s19 = sphi 0, %s21
      %s22 = sphi 0, %s19
      %s23 = sphi 0, %s22
      %s39 = sphi 0, %s23
      %s45 = sphi 0, %s47
      %s48 = sphi 0, %s45
      %s49 = sphi 0, %s48
      %s65 = sphi 0, %s49
      %s69 = sphi 0, %s69
      %s71 = sphi 0, %s69
      %s72 = sphi 0, %s71
      %s86 = sphi 0, %s72
      %s92 = sphi 0, %s94
      %s95 = sphi 0, %s92
      %s96 = sphi 0, %s95
      %s112 = sphi 0, %s96
    $region4: #{segment_position_encoding.1} parent=1 // loop_header_branch
      %12 = sbr.rel (%p10) target = $region8
    $region5: #{segment_position_encoding.1} parent=1 // loop_body
      %s14 = ssub.s32 %s9, 1
      %s15 = ssub.s32 %s9, 2
      %s16 = sadd.s32 %s9, 1
      %s17 = ssub.s32 %s9, %s16
      %p18 = scmp.eq.s32.totalorder %s17, 0
      %s20 = sadd.s32 %s19, 1
      %s21 = scalar_select %p18, %s19, %s20
      %p24 = pneg %p18
      %p25 = scmp.eq.s32.totalorder %s9, 1
      %p26 = por %p24, %p25
      %p27 = scmp.ne.s32.totalorder %s19, %s22
      %p28 = scmp.eq.s32.totalorder %s9, 0
      %p29 = por %p27, %p28
      %p30 = scmp.ne.s32.totalorder %s19, %s22
      %p31 = scmp.eq.s32.totalorder %s14, 1
      %p32 = por %p30, %p31
      %p33 = scmp.ne.s32.totalorder %s22, %s23
      %p34 = scmp.eq.s32.totalorder %s14, 0
      %p35 = por %p33, %p34
      %p36 = scmp.ne.s32.totalorder %s22, %s23
      %p37 = scmp.eq.s32.totalorder %s15, 1
      %p38 = por %p36, %p37
      %p40 = scmp.ne.s32.totalorder %s23, %s39
      %p41 = scmp.eq.s32.totalorder %s15, 0
      %p42 = por %p40, %p41
      %s43 = ssub.s32 %s9, %s16
      %p44 = scmp.eq.s32.totalorder %s43, 0
      %s46 = sadd.s32 %s45, 1
      %s47 = scalar_select %p44, %s45, %s46
      %p50 = pneg %p44
      %p51 = scmp.eq.s32.totalorder %s9, 1
      %p52 = por %p50, %p51
      %p53 = scmp.ne.s32.totalorder %s45, %s48
      %p54 = scmp.eq.s32.totalorder %s9, 0
      %p55 = por %p53, %p54
      %p56 = scmp.ne.s32.totalorder %s45, %s48
      %p57 = scmp.eq.s32.totalorder %s14, 1
      %p58 = por %p56, %p57
      %p59 = scmp.ne.s32.totalorder %s48, %s49
      %p60 = scmp.eq.s32.totalorder %s14, 0
      %p61 = por %p59, %p60
      %p62 = scmp.ne.s32.totalorder %s48, %s49
      %p63 = scmp.eq.s32.totalorder %s15, 1
      %p64 = por %p62, %p63
      %p66 = scmp.ne.s32.totalorder %s49, %s65
      %p67 = scmp.eq.s32.totalorder %s15, 0
      %p68 = por %p66, %p67
      %s70 = sadd.s32 %s69, 1
      %p73 = scmp.eq.s32.totalorder %s9, 1
      %p74 = scmp.ne.s32.totalorder %s69, %s71
      %p75 = scmp.eq.s32.totalorder %s9, 0
      %p76 = por %p74, %p75
      %p77 = scmp.ne.s32.totalorder %s69, %s71
      %p78 = scmp.eq.s32.totalorder %s14, 1
      %p79 = por %p77, %p78
      %p80 = scmp.ne.s32.totalorder %s71, %s72
      %p81 = scmp.eq.s32.totalorder %s14, 0
      %p82 = por %p80, %p81
      %p83 = scmp.ne.s32.totalorder %s71, %s72
      %p84 = scmp.eq.s32.totalorder %s15, 1
      %p85 = por %p83, %p84
      %p87 = scmp.ne.s32.totalorder %s72, %s86
      %p88 = scmp.eq.s32.totalorder %s15, 0
      %p89 = por %p87, %p88
      %s90 = ssub.s32 %s9, %s16
      %p91 = scmp.eq.s32.totalorder %s90, 0
      %s93 = sadd.s32 %s92, 1
      %s94 = scalar_select %p91, %s92, %s93
      %p97 = pneg %p91
      %p98 = scmp.eq.s32.totalorder %s9, 1
      %p99 = por %p97, %p98
      %p100 = scmp.ne.s32.totalorder %s92, %s95
      %p101 = scmp.eq.s32.totalorder %s9, 0
      %p102 = por %p100, %p101
      %p103 = scmp.ne.s32.totalorder %s92, %s95
      %p104 = scmp.eq.s32.totalorder %s14, 1
      %p105 = por %p103, %p104
      %p106 = scmp.ne.s32.totalorder %s95, %s96
      %p107 = scmp.eq.s32.totalorder %s14, 0
      %p108 = por %p106, %p107
      %p109 = scmp.ne.s32.totalorder %s95, %s96
      %p110 = scmp.eq.s32.totalorder %s15, 1
      %p111 = por %p109, %p110
      %p113 = scmp.ne.s32.totalorder %s96, %s112
      %p114 = scmp.eq.s32.totalorder %s15, 0
      %p115 = por %p113, %p114
      %p116 = scmp.le.s32.totalorder 1, %s9
      %p117 = scmp.lt.s32.totalorder %s9, 3
      %p118 = pnand %p116, %p117
      %p119 = pneg %p118
      // Predicated region
      $region9: #{segment_position_encoding.1} parent=5 // pred_check
        _
      $region10: #{segment_position_encoding.1} parent=5 // pred_check_branch
        %121 = sbr.rel (%p118) target = $region12
      $region11: #{segment_position_encoding.1} parent=5 // pred_region
        %s122 = ssub.s32 %s9, 1
        // Predicated region
        $region13: #{segment_position_encoding.1} parent=11 // pred_check
          %p123 = pneg %p82
        $region14: #{segment_position_encoding.1} parent=11 // pred_check_branch
          %125 = sbr.rel (%p123) target = $region16
        $region15: #{segment_position_encoding.1} parent=11 // pred_region
          _
        $region16: #{segment_position_encoding.1} parent=11 // pred_fallthru
          _
      $region12: #{segment_position_encoding.1} parent=5 // pred_fallthru
        _
      %p126 = scmp.lt.s32.totalorder %s9, 2
      // Predicated region
      $region17: #{segment_position_encoding.1} parent=5 // pred_check
        %p127 = pneg %p126
      $region18: #{segment_position_encoding.1} parent=5 // pred_check_branch
        %129 = sbr.rel (%p127) target = $region20
      $region19: #{segment_position_encoding.1} parent=5 // pred_region
        // Predicated region
        $region21: #{segment_position_encoding.1} parent=19 // pred_check
          %p130 = pneg %p29
        $region22: #{segment_position_encoding.1} parent=19 // pred_check_branch
          %132 = sbr.rel (%p130) target = $region24
        $region23: #{segment_position_encoding.1} parent=19 // pred_region
          %s133 = smul.u32 64, %s9
          %s134 = ssub.s32 120, %s133
          %p135 = scmp.lt.s32.totalorder %s134, 64
          %s136 = scalar_select %p135, %s134, 64
          %s137 = smul.u32 128, %s136
          %p138 = scmp.lt.s32.totalorder %s133, 119
          %s139 = scalar_select %p138, %s133, 119
          %s140 = smul.addr %s139, 8
          %s141 = scalar_lea.vmem %s0, %s140
          %s142 = smul.u32 64, %s9
          %s143 = ssub.s32 120, %s142
          %p144 = scmp.lt.s32.totalorder %s143, 64
          %s145 = scalar_select %p144, %s143, 64
          %s146 = smul.u32 128, %s145
        $region24: #{segment_position_encoding.1} parent=19 // pred_fallthru
          _
        // Predicated region
        $region25: #{segment_position_encoding.1} parent=19 // pred_check
          %p147 = pneg %p55
        $region26: #{segment_position_encoding.1} parent=19 // pred_check_branch
          %149 = sbr.rel (%p147) target = $region28
        $region27: #{segment_position_encoding.1} parent=19 // pred_region
          %s150 = smul.u32 64, %s9
          %s151 = ssub.s32 120, %s150
          %p152 = scmp.lt.s32.totalorder %s151, 64
          %s153 = scalar_select %p152, %s151, 64
          %s154 = smul.u32 128, %s153
          %p155 = scmp.lt.s32.totalorder %s150, 119
          %s156 = scalar_select %p155, %s150, 119
          %s157 = smul.addr %s156, 8
          %s158 = scalar_lea.vmem %s1, %s157
          %s159 = smul.u32 64, %s9
          %s160 = ssub.s32 120, %s159
          %p161 = scmp.lt.s32.totalorder %s160, 64
          %s162 = scalar_select %p161, %s160, 64
          %s163 = smul.u32 128, %s162
        $region28: #{segment_position_encoding.1} parent=19 // pred_fallthru
          _
      $region20: #{segment_position_encoding.1} parent=5 // pred_fallthru
        _
      %p164 = scmp.le.s32.totalorder 1, %s9
      %p165 = scmp.lt.s32.totalorder %s9, 3
      %p166 = pnand %p164, %p165
      %p167 = pneg %p166
      // Predicated region
      $region29: #{segment_position_encoding.1} parent=5 // pred_check
        _
      $region30: #{segment_position_encoding.1} parent=5 // pred_check_branch
        %169 = sbr.rel (%p166) target = $region32
      $region31: #{segment_position_encoding.1} parent=5 // pred_region
        %s170 = ssub.s32 %s9, 1
        %s171 = smul.u32 64, %s14
        %s172 = ssub.s32 120, %s171
        %p173 = scmp.lt.s32.totalorder %s172, 64
        %s174 = scalar_select %p173, %s172, 64
        %s175 = smul.u32 128, %s174
        %p176 = scmp.lt.s32.totalorder %s171, 119
        %s177 = scalar_select %p176, %s171, 119
        %s178 = smul.addr %s177, 8
        %s179 = scalar_lea.vmem %s0, %s178
        %p180 = pneg %p35
        %p181 = pneg %p32
        %s182 = smul.u32 64, %s14
        %s183 = ssub.s32 120, %s182
        %p184 = scmp.lt.s32.totalorder %s183, 64
        %s185 = scalar_select %p184, %s183, 64
        %s186 = smul.u32 128, %s185
        %p187 = scmp.lt.s32.totalorder %s182, 119
        %s188 = scalar_select %p187, %s182, 119
        %s189 = smul.addr %s188, 8
        %s190 = scalar_lea.vmem %s1, %s189
        %p191 = pneg %p61
        %p192 = pneg %p58
        %p193 = pneg %p82
        %p194 = pneg %p79
        %p195 = pneg %p108
        %p196 = pneg %p105
        %s197 = sand.u32 %s95, 1
        %s198 = sand.u32 %s95, 1
        %s199 = smul.addr %s198, 512
        %s200 = scalar_lea.vmem [#allocation2], %s199
        %s201 = smul.u32 64, %s14
        %s202 = ssub.s32 120, %s201
        %p203 = scmp.lt.s32.totalorder %s202, 64
        %s204 = scalar_select %p203, %s202, 64
        %s205 = smul.u32 128, %s204
        %p206 = scmp.lt.s32.totalorder %s201, 119
        %s207 = scalar_select %p206, %s201, 119
        %s208 = smul.addr %s207, 8
        %s209 = scalar_lea.vmem %s0, %s208
        %s210 = smul.u32 64, %s14
        %s211 = ssub.s32 120, %s210
        %p212 = scmp.lt.s32.totalorder %s211, 64
        %s213 = scalar_select %p212, %s211, 64
        %s214 = smul.u32 128, %s213
        %s215 = smul.u32 64, %s14
        %s216 = ssub.s32 120, %s215
        %p217 = scmp.lt.s32.totalorder %s216, 64
        %s218 = scalar_select %p217, %s216, 64
        %s219 = smul.u32 128, %s218
        %p220 = scmp.lt.s32.totalorder %s215, 119
        %s221 = scalar_select %p220, %s215, 119
        %s222 = smul.addr %s221, 8
        %s223 = scalar_lea.vmem %s1, %s222
        %s224 = smul.u32 64, %s14
        %s225 = ssub.s32 120, %s224
        %p226 = scmp.lt.s32.totalorder %s225, 64
        %s227 = scalar_select %p226, %s225, 64
        %s228 = smul.u32 128, %s227
        %s229 = smul.u32 64, %s14
        %s230 = ssub.s32 120, %s229
        %p231 = scmp.lt.s32.totalorder %s230, 64
        %s232 = scalar_select %p231, %s230, 64
        %s233 = smul.u32 128, %s232
        %v234 = vld [vmem:[%s209] sm:$0xff]
        %v235 = vld [vmem:[%s209 + $0x8] sm:$0xff]
        %v236 = vld [vmem:[%s209 + $0x10] sm:$0xff]
        %v237 = vld [vmem:[%s209 + $0x18] sm:$0xff]
        %v238 = vld [vmem:[%s209 + $0x20] sm:$0xff]
        %v239 = vld [vmem:[%s209 + $0x28] sm:$0xff]
        %v240 = vld [vmem:[%s209 + $0x30] sm:$0xff]
        %v241 = vld [vmem:[%s209 + $0x38] sm:$0xff]
        %v242 = vld [vmem:[%s209 + $0x40] sm:$0xff]
        %v243 = vld [vmem:[%s209 + $0x48] sm:$0xff]
        %v244 = vld [vmem:[%s209 + $0x50] sm:$0xff]
        %v245 = vld [vmem:[%s209 + $0x58] sm:$0xff]
        %v246 = vld [vmem:[%s209 + $0x60] sm:$0xff]
        %v247 = vld [vmem:[%s209 + $0x68] sm:$0xff]
        %v248 = vld [vmem:[%s209 + $0x70] sm:$0xff]
        %v249 = vld [vmem:[%s209 + $0x78] sm:$0xff]
        %v250 = vld [vmem:[%s209 + $0x80] sm:$0xff]
        %v251 = vld [vmem:[%s209 + $0x88] sm:$0xff]
        %v252 = vld [vmem:[%s209 + $0x90] sm:$0xff]
        %v253 = vld [vmem:[%s209 + $0x98] sm:$0xff]
        %v254 = vld [vmem:[%s209 + $0xa0] sm:$0xff]
        %v255 = vld [vmem:[%s209 + $0xa8] sm:$0xff]
        %v256 = vld [vmem:[%s209 + $0xb0] sm:$0xff]
        %v257 = vld [vmem:[%s209 + $0xb8] sm:$0xff]
        %v258 = vld [vmem:[%s209 + $0xc0] sm:$0xff]
        %v259 = vld [vmem:[%s209 + $0xc8] sm:$0xff]
        %v260 = vld [vmem:[%s209 + $0xd0] sm:$0xff]
        %v261 = vld [vmem:[%s209 + $0xd8] sm:$0xff]
        %v262 = vld [vmem:[%s209 + $0xe0] sm:$0xff]
        %v263 = vld [vmem:[%s209 + $0xe8] sm:$0xff]
        %v264 = vld [vmem:[%s209 + $0xf0] sm:$0xff]
        %v265 = vld [vmem:[%s209 + $0xf8] sm:$0xff]
        %v266 = vld [vmem:[%s209 + $0x100] sm:$0xff]
        %v267 = vld [vmem:[%s209 + $0x108] sm:$0xff]
        %v268 = vld [vmem:[%s209 + $0x110] sm:$0xff]
        %v269 = vld [vmem:[%s209 + $0x118] sm:$0xff]
        %v270 = vld [vmem:[%s209 + $0x120] sm:$0xff]
        %v271 = vld [vmem:[%s209 + $0x128] sm:$0xff]
        %v272 = vld [vmem:[%s209 + $0x130] sm:$0xff]
        %v273 = vld [vmem:[%s209 + $0x138] sm:$0xff]
        %v274 = vld [vmem:[%s209 + $0x140] sm:$0xff]
        %v275 = vld [vmem:[%s209 + $0x148] sm:$0xff]
        %v276 = vld [vmem:[%s209 + $0x150] sm:$0xff]
        %v277 = vld [vmem:[%s209 + $0x158] sm:$0xff]
        %v278 = vld [vmem:[%s209 + $0x160] sm:$0xff]
        %v279 = vld [vmem:[%s209 + $0x168] sm:$0xff]
        %v280 = vld [vmem:[%s209 + $0x170] sm:$0xff]
        %v281 = vld [vmem:[%s209 + $0x178] sm:$0xff]
        %v282 = vld [vmem:[%s209 + $0x180] sm:$0xff]
        %v283 = vld [vmem:[%s209 + $0x188] sm:$0xff]
        %v284 = vld [vmem:[%s209 + $0x190] sm:$0xff]
        %v285 = vld [vmem:[%s209 + $0x198] sm:$0xff]
        %v286 = vld [vmem:[%s209 + $0x1a0] sm:$0xff]
        %v287 = vld [vmem:[%s209 + $0x1a8] sm:$0xff]
        %v288 = vld [vmem:[%s209 + $0x1b0] sm:$0xff]
        %v289 = vld [vmem:[%s209 + $0x1b8] sm:$0xff]
        %v290 = vld [vmem:[%s209 + $0x1c0] sm:$0xff]
        %v291 = vld [vmem:[%s209 + $0x1c8] sm:$0xff]
        %v292 = vld [vmem:[%s209 + $0x1d0] sm:$0xff]
        %v293 = vld [vmem:[%s209 + $0x1d8] sm:$0xff]
        %v294 = vld [vmem:[%s209 + $0x1e0] sm:$0xff]
        %v295 = vld [vmem:[%s209 + $0x1e8] sm:$0xff]
        %v296 = vld [vmem:[%s209 + $0x1f0] sm:$0xff]
        %v297 = vld [vmem:[%s209 + $0x1f8] sm:$0xff]
        %v298 = vld [vmem:[%s223] sm:$0xff]
        %v299 = vld [vmem:[%s223 + $0x8] sm:$0xff]
        %v300 = vld [vmem:[%s223 + $0x10] sm:$0xff]
        %v301 = vld [vmem:[%s223 + $0x18] sm:$0xff]
        %v302 = vld [vmem:[%s223 + $0x20] sm:$0xff]
        %v303 = vld [vmem:[%s223 + $0x28] sm:$0xff]
        %v304 = vld [vmem:[%s223 + $0x30] sm:$0xff]
        %v305 = vld [vmem:[%s223 + $0x38] sm:$0xff]
        %v306 = vld [vmem:[%s223 + $0x40] sm:$0xff]
        %v307 = vld [vmem:[%s223 + $0x48] sm:$0xff]
        %v308 = vld [vmem:[%s223 + $0x50] sm:$0xff]
        %v309 = vld [vmem:[%s223 + $0x58] sm:$0xff]
        %v310 = vld [vmem:[%s223 + $0x60] sm:$0xff]
        %v311 = vld [vmem:[%s223 + $0x68] sm:$0xff]
        %v312 = vld [vmem:[%s223 + $0x70] sm:$0xff]
        %v313 = vld [vmem:[%s223 + $0x78] sm:$0xff]
        %v314 = vld [vmem:[%s223 + $0x80] sm:$0xff]
        %v315 = vld [vmem:[%s223 + $0x88] sm:$0xff]
        %v316 = vld [vmem:[%s223 + $0x90] sm:$0xff]
        %v317 = vld [vmem:[%s223 + $0x98] sm:$0xff]
        %v318 = vld [vmem:[%s223 + $0xa0] sm:$0xff]
        %v319 = vld [vmem:[%s223 + $0xa8] sm:$0xff]
        %v320 = vld [vmem:[%s223 + $0xb0] sm:$0xff]
        %v321 = vld [vmem:[%s223 + $0xb8] sm:$0xff]
        %v322 = vld [vmem:[%s223 + $0xc0] sm:$0xff]
        %v323 = vld [vmem:[%s223 + $0xc8] sm:$0xff]
        %v324 = vld [vmem:[%s223 + $0xd0] sm:$0xff]
        %v325 = vld [vmem:[%s223 + $0xd8] sm:$0xff]
        %v326 = vld [vmem:[%s223 + $0xe0] sm:$0xff]
        %v327 = vld [vmem:[%s223 + $0xe8] sm:$0xff]
        %v328 = vld [vmem:[%s223 + $0xf0] sm:$0xff]
        %v329 = vld [vmem:[%s223 + $0xf8] sm:$0xff]
        %v330 = vld [vmem:[%s223 + $0x100] sm:$0xff]
        %v331 = vld [vmem:[%s223 + $0x108] sm:$0xff]
        %v332 = vld [vmem:[%s223 + $0x110] sm:$0xff]
        %v333 = vld [vmem:[%s223 + $0x118] sm:$0xff]
        %v334 = vld [vmem:[%s223 + $0x120] sm:$0xff]
        %v335 = vld [vmem:[%s223 + $0x128] sm:$0xff]
        %v336 = vld [vmem:[%s223 + $0x130] sm:$0xff]
        %v337 = vld [vmem:[%s223 + $0x138] sm:$0xff]
        %v338 = vld [vmem:[%s223 + $0x140] sm:$0xff]
        %v339 = vld [vmem:[%s223 + $0x148] sm:$0xff]
        %v340 = vld [vmem:[%s223 + $0x150] sm:$0xff]
        %v341 = vld [vmem:[%s223 + $0x158] sm:$0xff]
        %v342 = vld [vmem:[%s223 + $0x160] sm:$0xff]
        %v343 = vld [vmem:[%s223 + $0x168] sm:$0xff]
        %v344 = vld [vmem:[%s223 + $0x170] sm:$0xff]
        %v345 = vld [vmem:[%s223 + $0x178] sm:$0xff]
        %v346 = vld [vmem:[%s223 + $0x180] sm:$0xff]
        %v347 = vld [vmem:[%s223 + $0x188] sm:$0xff]
        %v348 = vld [vmem:[%s223 + $0x190] sm:$0xff]
        %v349 = vld [vmem:[%s223 + $0x198] sm:$0xff]
        %v350 = vld [vmem:[%s223 + $0x1a0] sm:$0xff]
        %v351 = vld [vmem:[%s223 + $0x1a8] sm:$0xff]
        %v352 = vld [vmem:[%s223 + $0x1b0] sm:$0xff]
        %v353 = vld [vmem:[%s223 + $0x1b8] sm:$0xff]
        %v354 = vld [vmem:[%s223 + $0x1c0] sm:$0xff]
        %v355 = vld [vmem:[%s223 + $0x1c8] sm:$0xff]
        %v356 = vld [vmem:[%s223 + $0x1d0] sm:$0xff]
        %v357 = vld [vmem:[%s223 + $0x1d8] sm:$0xff]
        %v358 = vld [vmem:[%s223 + $0x1e0] sm:$0xff]
        %v359 = vld [vmem:[%s223 + $0x1e8] sm:$0xff]
        %v360 = vld [vmem:[%s223 + $0x1f0] sm:$0xff]
        %v361 = vld [vmem:[%s223 + $0x1f8] sm:$0xff]
        %v362 = vlaneseq
        %v363 = vand.u32 %v362, 127
        %v364 = vadd.s32 %v363, 128
        %365 = vset.pattern.permute.xlu0 0
        %366 = vperm.xlu0 %365, %v298
        %v367 = vpop.permute.xlu0 %366
        %368 = vset.pattern.permute.xlu0 0
        %369 = vperm.xlu0 %368, %v299
        %v370 = vpop.permute.xlu0 %369
        %371 = vset.pattern.permute.xlu0 0
        %372 = vperm.xlu0 %371, %v300
        %v373 = vpop.permute.xlu0 %372
        %374 = vset.pattern.permute.xlu0 0
        %375 = vperm.xlu0 %374, %v301
        %v376 = vpop.permute.xlu0 %375
        %377 = vset.pattern.permute.xlu0 0
        %378 = vperm.xlu0 %377, %v302
        %v379 = vpop.permute.xlu0 %378
        %380 = vset.pattern.permute.xlu0 0
        %381 = vperm.xlu0 %380, %v303
        %v382 = vpop.permute.xlu0 %381
        %383 = vset.pattern.permute.xlu0 0
        %384 = vperm.xlu0 %383, %v304
        %v385 = vpop.permute.xlu0 %384
        %386 = vset.pattern.permute.xlu0 0
        %387 = vperm.xlu0 %386, %v305
        %v388 = vpop.permute.xlu0 %387
        %389 = vset.pattern.permute.xlu0 0
        %390 = vperm.xlu0 %389, %v306
        %v391 = vpop.permute.xlu0 %390
        %392 = vset.pattern.permute.xlu0 0
        %393 = vperm.xlu0 %392, %v307
        %v394 = vpop.permute.xlu0 %393
        %395 = vset.pattern.permute.xlu0 0
        %396 = vperm.xlu0 %395, %v308
        %v397 = vpop.permute.xlu0 %396
        %398 = vset.pattern.permute.xlu0 0
        %399 = vperm.xlu0 %398, %v309
        %v400 = vpop.permute.xlu0 %399
        %401 = vset.pattern.permute.xlu0 0
        %402 = vperm.xlu0 %401, %v310
        %v403 = vpop.permute.xlu0 %402
        %404 = vset.pattern.permute.xlu0 0
        %405 = vperm.xlu0 %404, %v311
        %v406 = vpop.permute.xlu0 %405
        %407 = vset.pattern.permute.xlu0 0
        %408 = vperm.xlu0 %407, %v312
        %v409 = vpop.permute.xlu0 %408
        %410 = vset.pattern.permute.xlu0 0
        %411 = vperm.xlu0 %410, %v313
        %v412 = vpop.permute.xlu0 %411
        %413 = vset.pattern.permute.xlu0 0
        %414 = vperm.xlu0 %413, %v314
        %v415 = vpop.permute.xlu0 %414
        %416 = vset.pattern.permute.xlu0 0
        %417 = vperm.xlu0 %416, %v315
        %v418 = vpop.permute.xlu0 %417
        %419 = vset.pattern.permute.xlu0 0
        %420 = vperm.xlu0 %419, %v316
        %v421 = vpop.permute.xlu0 %420
        %422 = vset.pattern.permute.xlu0 0
        %423 = vperm.xlu0 %422, %v317
        %v424 = vpop.permute.xlu0 %423
        %425 = vset.pattern.permute.xlu0 0
        %426 = vperm.xlu0 %425, %v318
        %v427 = vpop.permute.xlu0 %426
        %428 = vset.pattern.permute.xlu0 0
        %429 = vperm.xlu0 %428, %v319
        %v430 = vpop.permute.xlu0 %429
        %431 = vset.pattern.permute.xlu0 0
        %432 = vperm.xlu0 %431, %v320
        %v433 = vpop.permute.xlu0 %432
        %434 = vset.pattern.permute.xlu0 0
        %435 = vperm.xlu0 %434, %v321
        %v436 = vpop.permute.xlu0 %435
        %437 = vset.pattern.permute.xlu0 0
        %438 = vperm.xlu0 %437, %v322
        %v439 = vpop.permute.xlu0 %438
        %440 = vset.pattern.permute.xlu0 0
        %441 = vperm.xlu0 %440, %v323
        %v442 = vpop.permute.xlu0 %441
        %443 = vset.pattern.permute.xlu0 0
        %444 = vperm.xlu0 %443, %v324
        %v445 = vpop.permute.xlu0 %444
        %446 = vset.pattern.permute.xlu0 0
        %447 = vperm.xlu0 %446, %v325
        %v448 = vpop.permute.xlu0 %447
        %449 = vset.pattern.permute.xlu0 0
        %450 = vperm.xlu0 %449, %v326
        %v451 = vpop.permute.xlu0 %450
        %452 = vset.pattern.permute.xlu0 0
        %453 = vperm.xlu0 %452, %v327
        %v454 = vpop.permute.xlu0 %453
        %455 = vset.pattern.permute.xlu0 0
        %456 = vperm.xlu0 %455, %v328
        %v457 = vpop.permute.xlu0 %456
        %458 = vset.pattern.permute.xlu0 0
        %459 = vperm.xlu0 %458, %v329
        %v460 = vpop.permute.xlu0 %459
        %461 = vset.pattern.permute.xlu0 0
        %462 = vperm.xlu0 %461, %v330
        %v463 = vpop.permute.xlu0 %462
        %464 = vset.pattern.permute.xlu0 0
        %465 = vperm.xlu0 %464, %v331
        %v466 = vpop.permute.xlu0 %465
        %467 = vset.pattern.permute.xlu0 0
        %468 = vperm.xlu0 %467, %v332
        %v469 = vpop.permute.xlu0 %468
        %470 = vset.pattern.permute.xlu0 0
        %471 = vperm.xlu0 %470, %v333
        %v472 = vpop.permute.xlu0 %471
        %473 = vset.pattern.permute.xlu0 0
        %474 = vperm.xlu0 %473, %v334
        %v475 = vpop.permute.xlu0 %474
        %476 = vset.pattern.permute.xlu0 0
        %477 = vperm.xlu0 %476, %v335
        %v478 = vpop.permute.xlu0 %477
        %479 = vset.pattern.permute.xlu0 0
        %480 = vperm.xlu0 %479, %v336
        %v481 = vpop.permute.xlu0 %480
        %482 = vset.pattern.permute.xlu0 0
        %483 = vperm.xlu0 %482, %v337
        %v484 = vpop.permute.xlu0 %483
        %485 = vset.pattern.permute.xlu0 0
        %486 = vperm.xlu0 %485, %v338
        %v487 = vpop.permute.xlu0 %486
        %488 = vset.pattern.permute.xlu0 0
        %489 = vperm.xlu0 %488, %v339
        %v490 = vpop.permute.xlu0 %489
        %491 = vset.pattern.permute.xlu0 0
        %492 = vperm.xlu0 %491, %v340
        %v493 = vpop.permute.xlu0 %492
        %494 = vset.pattern.permute.xlu0 0
        %495 = vperm.xlu0 %494, %v341
        %v496 = vpop.permute.xlu0 %495
        %497 = vset.pattern.permute.xlu0 0
        %498 = vperm.xlu0 %497, %v342
        %v499 = vpop.permute.xlu0 %498
        %500 = vset.pattern.permute.xlu0 0
        %501 = vperm.xlu0 %500, %v343
        %v502 = vpop.permute.xlu0 %501
        %503 = vset.pattern.permute.xlu0 0
        %504 = vperm.xlu0 %503, %v344
        %v505 = vpop.permute.xlu0 %504
        %506 = vset.pattern.permute.xlu0 0
        %507 = vperm.xlu0 %506, %v345
        %v508 = vpop.permute.xlu0 %507
        %509 = vset.pattern.permute.xlu0 0
        %510 = vperm.xlu0 %509, %v346
        %v511 = vpop.permute.xlu0 %510
        %512 = vset.pattern.permute.xlu0 0
        %513 = vperm.xlu0 %512, %v347
        %v514 = vpop.permute.xlu0 %513
        %515 = vset.pattern.permute.xlu0 0
        %516 = vperm.xlu0 %515, %v348
        %v517 = vpop.permute.xlu0 %516
        %518 = vset.pattern.permute.xlu0 0
        %519 = vperm.xlu0 %518, %v349
        %v520 = vpop.permute.xlu0 %519
        %521 = vset.pattern.permute.xlu0 0
        %522 = vperm.xlu0 %521, %v350
        %v523 = vpop.permute.xlu0 %522
        %524 = vset.pattern.permute.xlu0 0
        %525 = vperm.xlu0 %524, %v351
        %v526 = vpop.permute.xlu0 %525
        %527 = vset.pattern.permute.xlu0 0
        %528 = vperm.xlu0 %527, %v352
        %v529 = vpop.permute.xlu0 %528
        %530 = vset.pattern.permute.xlu0 0
        %531 = vperm.xlu0 %530, %v353
        %v532 = vpop.permute.xlu0 %531
        %533 = vset.pattern.permute.xlu0 0
        %534 = vperm.xlu0 %533, %v354
        %v535 = vpop.permute.xlu0 %534
        %536 = vset.pattern.permute.xlu0 0
        %537 = vperm.xlu0 %536, %v355
        %v538 = vpop.permute.xlu0 %537
        %539 = vset.pattern.permute.xlu0 0
        %540 = vperm.xlu0 %539, %v356
        %v541 = vpop.permute.xlu0 %540
        %542 = vset.pattern.permute.xlu0 0
        %543 = vperm.xlu0 %542, %v357
        %v544 = vpop.permute.xlu0 %543
        %545 = vset.pattern.permute.xlu0 0
        %546 = vperm.xlu0 %545, %v358
        %v547 = vpop.permute.xlu0 %546
        %548 = vset.pattern.permute.xlu0 0
        %549 = vperm.xlu0 %548, %v359
        %v550 = vpop.permute.xlu0 %549
        %551 = vset.pattern.permute.xlu0 0
        %552 = vperm.xlu0 %551, %v360
        %v553 = vpop.permute.xlu0 %552
        %554 = vset.pattern.permute.xlu0 0
        %555 = vperm.xlu0 %554, %v361
        %v556 = vpop.permute.xlu0 %555
        %vm557 = vcmp.eq.s32.totalorder %v363, %v367
        %vm558 = vcmp.eq.s32.totalorder %v364, %v367
        %vm559 = vcmp.eq.s32.totalorder %v363, %v370
        %vm560 = vcmp.eq.s32.totalorder %v364, %v370
        %vm561 = vcmp.eq.s32.totalorder %v363, %v373
        %vm562 = vcmp.eq.s32.totalorder %v364, %v373
        %vm563 = vcmp.eq.s32.totalorder %v363, %v376
        %vm564 = vcmp.eq.s32.totalorder %v364, %v376
        %vm565 = vcmp.eq.s32.totalorder %v363, %v379
        %vm566 = vcmp.eq.s32.totalorder %v364, %v379
        %vm567 = vcmp.eq.s32.totalorder %v363, %v382
        %vm568 = vcmp.eq.s32.totalorder %v364, %v382
        %vm569 = vcmp.eq.s32.totalorder %v363, %v385
        %vm570 = vcmp.eq.s32.totalorder %v364, %v385
        %vm571 = vcmp.eq.s32.totalorder %v363, %v388
        %vm572 = vcmp.eq.s32.totalorder %v364, %v388
        %vm573 = vcmp.eq.s32.totalorder %v363, %v391
        %vm574 = vcmp.eq.s32.totalorder %v364, %v391
        %vm575 = vcmp.eq.s32.totalorder %v363, %v394
        %vm576 = vcmp.eq.s32.totalorder %v364, %v394
        %vm577 = vcmp.eq.s32.totalorder %v363, %v397
        %vm578 = vcmp.eq.s32.totalorder %v364, %v397
        %vm579 = vcmp.eq.s32.totalorder %v363, %v400
        %vm580 = vcmp.eq.s32.totalorder %v364, %v400
        %vm581 = vcmp.eq.s32.totalorder %v363, %v403
        %vm582 = vcmp.eq.s32.totalorder %v364, %v403
        %vm583 = vcmp.eq.s32.totalorder %v363, %v406
        %vm584 = vcmp.eq.s32.totalorder %v364, %v406
        %vm585 = vcmp.eq.s32.totalorder %v363, %v409
        %vm586 = vcmp.eq.s32.totalorder %v364, %v409
        %vm587 = vcmp.eq.s32.totalorder %v363, %v412
        %vm588 = vcmp.eq.s32.totalorder %v364, %v412
        %vm589 = vcmp.eq.s32.totalorder %v363, %v415
        %vm590 = vcmp.eq.s32.totalorder %v364, %v415
        %vm591 = vcmp.eq.s32.totalorder %v363, %v418
        %vm592 = vcmp.eq.s32.totalorder %v364, %v418
        %vm593 = vcmp.eq.s32.totalorder %v363, %v421
        %vm594 = vcmp.eq.s32.totalorder %v364, %v421
        %vm595 = vcmp.eq.s32.totalorder %v363, %v424
        %vm596 = vcmp.eq.s32.totalorder %v364, %v424
        %vm597 = vcmp.eq.s32.totalorder %v363, %v427
        %vm598 = vcmp.eq.s32.totalorder %v364, %v427
        %vm599 = vcmp.eq.s32.totalorder %v363, %v430
        %vm600 = vcmp.eq.s32.totalorder %v364, %v430
        %vm601 = vcmp.eq.s32.totalorder %v363, %v433
        %vm602 = vcmp.eq.s32.totalorder %v364, %v433
        %vm603 = vcmp.eq.s32.totalorder %v363, %v436
        %vm604 = vcmp.eq.s32.totalorder %v364, %v436
        %vm605 = vcmp.eq.s32.totalorder %v363, %v439
        %vm606 = vcmp.eq.s32.totalorder %v364, %v439
        %vm607 = vcmp.eq.s32.totalorder %v363, %v442
        %vm608 = vcmp.eq.s32.totalorder %v364, %v442
        %vm609 = vcmp.eq.s32.totalorder %v363, %v445
        %vm610 = vcmp.eq.s32.totalorder %v364, %v445
        %vm611 = vcmp.eq.s32.totalorder %v363, %v448
        %vm612 = vcmp.eq.s32.totalorder %v364, %v448
        %vm613 = vcmp.eq.s32.totalorder %v363, %v451
        %vm614 = vcmp.eq.s32.totalorder %v364, %v451
        %vm615 = vcmp.eq.s32.totalorder %v363, %v454
        %vm616 = vcmp.eq.s32.totalorder %v364, %v454
        %vm617 = vcmp.eq.s32.totalorder %v363, %v457
        %vm618 = vcmp.eq.s32.totalorder %v364, %v457
        %vm619 = vcmp.eq.s32.totalorder %v363, %v460
        %vm620 = vcmp.eq.s32.totalorder %v364, %v460
        %vm621 = vcmp.eq.s32.totalorder %v363, %v463
        %vm622 = vcmp.eq.s32.totalorder %v364, %v463
        %vm623 = vcmp.eq.s32.totalorder %v363, %v466
        %vm624 = vcmp.eq.s32.totalorder %v364, %v466
        %vm625 = vcmp.eq.s32.totalorder %v363, %v469
        %vm626 = vcmp.eq.s32.totalorder %v364, %v469
        %vm627 = vcmp.eq.s32.totalorder %v363, %v472
        %vm628 = vcmp.eq.s32.totalorder %v364, %v472
        %vm629 = vcmp.eq.s32.totalorder %v363, %v475
        %vm630 = vcmp.eq.s32.totalorder %v364, %v475
        %vm631 = vcmp.eq.s32.totalorder %v363, %v478
        %vm632 = vcmp.eq.s32.totalorder %v364, %v478
        %vm633 = vcmp.eq.s32.totalorder %v363, %v481
        %vm634 = vcmp.eq.s32.totalorder %v364, %v481
        %vm635 = vcmp.eq.s32.totalorder %v363, %v484
        %vm636 = vcmp.eq.s32.totalorder %v364, %v484
        %vm637 = vcmp.eq.s32.totalorder %v363, %v487
        %vm638 = vcmp.eq.s32.totalorder %v364, %v487
        %vm639 = vcmp.eq.s32.totalorder %v363, %v490
        %vm640 = vcmp.eq.s32.totalorder %v364, %v490
        %vm641 = vcmp.eq.s32.totalorder %v363, %v493
        %vm642 = vcmp.eq.s32.totalorder %v364, %v493
        %vm643 = vcmp.eq.s32.totalorder %v363, %v496
        %vm644 = vcmp.eq.s32.totalorder %v364, %v496
        %vm645 = vcmp.eq.s32.totalorder %v363, %v499
        %vm646 = vcmp.eq.s32.totalorder %v364, %v499
        %vm647 = vcmp.eq.s32.totalorder %v363, %v502
        %vm648 = vcmp.eq.s32.totalorder %v364, %v502
        %vm649 = vcmp.eq.s32.totalorder %v363, %v505
        %vm650 = vcmp.eq.s32.totalorder %v364, %v505
        %vm651 = vcmp.eq.s32.totalorder %v363, %v508
        %vm652 = vcmp.eq.s32.totalorder %v364, %v508
        %vm653 = vcmp.eq.s32.totalorder %v363, %v511
        %vm654 = vcmp.eq.s32.totalorder %v364, %v511
        %vm655 = vcmp.eq.s32.totalorder %v363, %v514
        %vm656 = vcmp.eq.s32.totalorder %v364, %v514
        %vm657 = vcmp.eq.s32.totalorder %v363, %v517
        %vm658 = vcmp.eq.s32.totalorder %v364, %v517
        %vm659 = vcmp.eq.s32.totalorder %v363, %v520
        %vm660 = vcmp.eq.s32.totalorder %v364, %v520
        %vm661 = vcmp.eq.s32.totalorder %v363, %v523
        %vm662 = vcmp.eq.s32.totalorder %v364, %v523
        %vm663 = vcmp.eq.s32.totalorder %v363, %v526
        %vm664 = vcmp.eq.s32.totalorder %v364, %v526
        %vm665 = vcmp.eq.s32.totalorder %v363, %v529
        %vm666 = vcmp.eq.s32.totalorder %v364, %v529
        %vm667 = vcmp.eq.s32.totalorder %v363, %v532
        %vm668 = vcmp.eq.s32.totalorder %v364, %v532
        %vm669 = vcmp.eq.s32.totalorder %v363, %v535
        %vm670 = vcmp.eq.s32.totalorder %v364, %v535
        %vm671 = vcmp.eq.s32.totalorder %v363, %v538
        %vm672 = vcmp.eq.s32.totalorder %v364, %v538
        %vm673 = vcmp.eq.s32.totalorder %v363, %v541
        %vm674 = vcmp.eq.s32.totalorder %v364, %v541
        %vm675 = vcmp.eq.s32.totalorder %v363, %v544
        %vm676 = vcmp.eq.s32.totalorder %v364, %v544
        %vm677 = vcmp.eq.s32.totalorder %v363, %v547
        %vm678 = vcmp.eq.s32.totalorder %v364, %v547
        %vm679 = vcmp.eq.s32.totalorder %v363, %v550
        %vm680 = vcmp.eq.s32.totalorder %v364, %v550
        %vm681 = vcmp.eq.s32.totalorder %v363, %v553
        %vm682 = vcmp.eq.s32.totalorder %v364, %v553
        %vm683 = vcmp.eq.s32.totalorder %v363, %v556
        %vm684 = vcmp.eq.s32.totalorder %v364, %v556
        %v685 = vsel %vm557, 1, 0
        %v686 = vsel %vm558, 1, 0
        %v687 = vsel %vm559, 1, 0
        %v688 = vsel %vm560, 1, 0
        %v689 = vsel %vm561, 1, 0
        %v690 = vsel %vm562, 1, 0
        %v691 = vsel %vm563, 1, 0
        %v692 = vsel %vm564, 1, 0
        %v693 = vsel %vm565, 1, 0
        %v694 = vsel %vm566, 1, 0
        %v695 = vsel %vm567, 1, 0
        %v696 = vsel %vm568, 1, 0
        %v697 = vsel %vm569, 1, 0
        %v698 = vsel %vm570, 1, 0
        %v699 = vsel %vm571, 1, 0
        %v700 = vsel %vm572, 1, 0
        %v701 = vsel %vm573, 1, 0
        %v702 = vsel %vm574, 1, 0
        %v703 = vsel %vm575, 1, 0
        %v704 = vsel %vm576, 1, 0
        %v705 = vsel %vm577, 1, 0
        %v706 = vsel %vm578, 1, 0
        %v707 = vsel %vm579, 1, 0
        %v708 = vsel %vm580, 1, 0
        %v709 = vsel %vm581, 1, 0
        %v710 = vsel %vm582, 1, 0
        %v711 = vsel %vm583, 1, 0
        %v712 = vsel %vm584, 1, 0
        %v713 = vsel %vm585, 1, 0
        %v714 = vsel %vm586, 1, 0
        %v715 = vsel %vm587, 1, 0
        %v716 = vsel %vm588, 1, 0
        %v717 = vsel %vm589, 1, 0
        %v718 = vsel %vm590, 1, 0
        %v719 = vsel %vm591, 1, 0
        %v720 = vsel %vm592, 1, 0
        %v721 = vsel %vm593, 1, 0
        %v722 = vsel %vm594, 1, 0
        %v723 = vsel %vm595, 1, 0
        %v724 = vsel %vm596, 1, 0
        %v725 = vsel %vm597, 1, 0
        %v726 = vsel %vm598, 1, 0
        %v727 = vsel %vm599, 1, 0
        %v728 = vsel %vm600, 1, 0
        %v729 = vsel %vm601, 1, 0
        %v730 = vsel %vm602, 1, 0
        %v731 = vsel %vm603, 1, 0
        %v732 = vsel %vm604, 1, 0
        %v733 = vsel %vm605, 1, 0
        %v734 = vsel %vm606, 1, 0
        %v735 = vsel %vm607, 1, 0
        %v736 = vsel %vm608, 1, 0
        %v737 = vsel %vm609, 1, 0
        %v738 = vsel %vm610, 1, 0
        %v739 = vsel %vm611, 1, 0
        %v740 = vsel %vm612, 1, 0
        %v741 = vsel %vm613, 1, 0
        %v742 = vsel %vm614, 1, 0
        %v743 = vsel %vm615, 1, 0
        %v744 = vsel %vm616, 1, 0
        %v745 = vsel %vm617, 1, 0
        %v746 = vsel %vm618, 1, 0
        %v747 = vsel %vm619, 1, 0
        %v748 = vsel %vm620, 1, 0
        %v749 = vsel %vm621, 1, 0
        %v750 = vsel %vm622, 1, 0
        %v751 = vsel %vm623, 1, 0
        %v752 = vsel %vm624, 1, 0
        %v753 = vsel %vm625, 1, 0
        %v754 = vsel %vm626, 1, 0
        %v755 = vsel %vm627, 1, 0
        %v756 = vsel %vm628, 1, 0
        %v757 = vsel %vm629, 1, 0
        %v758 = vsel %vm630, 1, 0
        %v759 = vsel %vm631, 1, 0
        %v760 = vsel %vm632, 1, 0
        %v761 = vsel %vm633, 1, 0
        %v762 = vsel %vm634, 1, 0
        %v763 = vsel %vm635, 1, 0
        %v764 = vsel %vm636, 1, 0
        %v765 = vsel %vm637, 1, 0
        %v766 = vsel %vm638, 1, 0
        %v767 = vsel %vm639, 1, 0
        %v768 = vsel %vm640, 1, 0
        %v769 = vsel %vm641, 1, 0
        %v770 = vsel %vm642, 1, 0
        %v771 = vsel %vm643, 1, 0
        %v772 = vsel %vm644, 1, 0
        %v773 = vsel %vm645, 1, 0
        %v774 = vsel %vm646, 1, 0
        %v775 = vsel %vm647, 1, 0
        %v776 = vsel %vm648, 1, 0
        %v777 = vsel %vm649, 1, 0
        %v778 = vsel %vm650, 1, 0
        %v779 = vsel %vm651, 1, 0
        %v780 = vsel %vm652, 1, 0
        %v781 = vsel %vm653, 1, 0
        %v782 = vsel %vm654, 1, 0
        %v783 = vsel %vm655, 1, 0
        %v784 = vsel %vm656, 1, 0
        %v785 = vsel %vm657, 1, 0
        %v786 = vsel %vm658, 1, 0
        %v787 = vsel %vm659, 1, 0
        %v788 = vsel %vm660, 1, 0
        %v789 = vsel %vm661, 1, 0
        %v790 = vsel %vm662, 1, 0
        %v791 = vsel %vm663, 1, 0
        %v792 = vsel %vm664, 1, 0
        %v793 = vsel %vm665, 1, 0
        %v794 = vsel %vm666, 1, 0
        %v795 = vsel %vm667, 1, 0
        %v796 = vsel %vm668, 1, 0
        %v797 = vsel %vm669, 1, 0
        %v798 = vsel %vm670, 1, 0
        %v799 = vsel %vm671, 1, 0
        %v800 = vsel %vm672, 1, 0
        %v801 = vsel %vm673, 1, 0
        %v802 = vsel %vm674, 1, 0
        %v803 = vsel %vm675, 1, 0
        %v804 = vsel %vm676, 1, 0
        %v805 = vsel %vm677, 1, 0
        %v806 = vsel %vm678, 1, 0
        %v807 = vsel %vm679, 1, 0
        %v808 = vsel %vm680, 1, 0
        %v809 = vsel %vm681, 1, 0
        %v810 = vsel %vm682, 1, 0
        %v811 = vsel %vm683, 1, 0
        %v812 = vsel %vm684, 1, 0
        %v813 = vcvt.s32.f32 %v685
        %v814 = vcvt.s32.f32 %v686
        %v815 = vcvt.s32.f32 %v687
        %v816 = vcvt.s32.f32 %v688
        %v817 = vcvt.s32.f32 %v689
        %v818 = vcvt.s32.f32 %v690
        %v819 = vcvt.s32.f32 %v691
        %v820 = vcvt.s32.f32 %v692
        %v821 = vcvt.s32.f32 %v693
        %v822 = vcvt.s32.f32 %v694
        %v823 = vcvt.s32.f32 %v695
        %v824 = vcvt.s32.f32 %v696
        %v825 = vcvt.s32.f32 %v697
        %v826 = vcvt.s32.f32 %v698
        %v827 = vcvt.s32.f32 %v699
        %v828 = vcvt.s32.f32 %v700
        %v829 = vcvt.s32.f32 %v701
        %v830 = vcvt.s32.f32 %v702
        %v831 = vcvt.s32.f32 %v703
        %v832 = vcvt.s32.f32 %v704
        %v833 = vcvt.s32.f32 %v705
        %v834 = vcvt.s32.f32 %v706
        %v835 = vcvt.s32.f32 %v707
        %v836 = vcvt.s32.f32 %v708
        %v837 = vcvt.s32.f32 %v709
        %v838 = vcvt.s32.f32 %v710
        %v839 = vcvt.s32.f32 %v711
        %v840 = vcvt.s32.f32 %v712
        %v841 = vcvt.s32.f32 %v713
        %v842 = vcvt.s32.f32 %v714
        %v843 = vcvt.s32.f32 %v715
        %v844 = vcvt.s32.f32 %v716
        %v845 = vcvt.s32.f32 %v717
        %v846 = vcvt.s32.f32 %v718
        %v847 = vcvt.s32.f32 %v719
        %v848 = vcvt.s32.f32 %v720
        %v849 = vcvt.s32.f32 %v721
        %v850 = vcvt.s32.f32 %v722
        %v851 = vcvt.s32.f32 %v723
        %v852 = vcvt.s32.f32 %v724
        %v853 = vcvt.s32.f32 %v725
        %v854 = vcvt.s32.f32 %v726
        %v855 = vcvt.s32.f32 %v727
        %v856 = vcvt.s32.f32 %v728
        %v857 = vcvt.s32.f32 %v729
        %v858 = vcvt.s32.f32 %v730
        %v859 = vcvt.s32.f32 %v731
        %v860 = vcvt.s32.f32 %v732
        %v861 = vcvt.s32.f32 %v733
        %v862 = vcvt.s32.f32 %v734
        %v863 = vcvt.s32.f32 %v735
        %v864 = vcvt.s32.f32 %v736
        %v865 = vcvt.s32.f32 %v737
        %v866 = vcvt.s32.f32 %v738
        %v867 = vcvt.s32.f32 %v739
        %v868 = vcvt.s32.f32 %v740
        %v869 = vcvt.s32.f32 %v741
        %v870 = vcvt.s32.f32 %v742
        %v871 = vcvt.s32.f32 %v743
        %v872 = vcvt.s32.f32 %v744
        %v873 = vcvt.s32.f32 %v745
        %v874 = vcvt.s32.f32 %v746
        %v875 = vcvt.s32.f32 %v747
        %v876 = vcvt.s32.f32 %v748
        %v877 = vcvt.s32.f32 %v749
        %v878 = vcvt.s32.f32 %v750
        %v879 = vcvt.s32.f32 %v751
        %v880 = vcvt.s32.f32 %v752
        %v881 = vcvt.s32.f32 %v753
        %v882 = vcvt.s32.f32 %v754
        %v883 = vcvt.s32.f32 %v755
        %v884 = vcvt.s32.f32 %v756
        %v885 = vcvt.s32.f32 %v757
        %v886 = vcvt.s32.f32 %v758
        %v887 = vcvt.s32.f32 %v759
        %v888 = vcvt.s32.f32 %v760
        %v889 = vcvt.s32.f32 %v761
        %v890 = vcvt.s32.f32 %v762
        %v891 = vcvt.s32.f32 %v763
        %v892 = vcvt.s32.f32 %v764
        %v893 = vcvt.s32.f32 %v765
        %v894 = vcvt.s32.f32 %v766
        %v895 = vcvt.s32.f32 %v767
        %v896 = vcvt.s32.f32 %v768
        %v897 = vcvt.s32.f32 %v769
        %v898 = vcvt.s32.f32 %v770
        %v899 = vcvt.s32.f32 %v771
        %v900 = vcvt.s32.f32 %v772
        %v901 = vcvt.s32.f32 %v773
        %v902 = vcvt.s32.f32 %v774
        %v903 = vcvt.s32.f32 %v775
        %v904 = vcvt.s32.f32 %v776
        %v905 = vcvt.s32.f32 %v777
        %v906 = vcvt.s32.f32 %v778
        %v907 = vcvt.s32.f32 %v779
        %v908 = vcvt.s32.f32 %v780
        %v909 = vcvt.s32.f32 %v781
        %v910 = vcvt.s32.f32 %v782
        %v911 = vcvt.s32.f32 %v783
        %v912 = vcvt.s32.f32 %v784
        %v913 = vcvt.s32.f32 %v785
        %v914 = vcvt.s32.f32 %v786
        %v915 = vcvt.s32.f32 %v787
        %v916 = vcvt.s32.f32 %v788
        %v917 = vcvt.s32.f32 %v789
        %v918 = vcvt.s32.f32 %v790
        %v919 = vcvt.s32.f32 %v791
        %v920 = vcvt.s32.f32 %v792
        %v921 = vcvt.s32.f32 %v793
        %v922 = vcvt.s32.f32 %v794
        %v923 = vcvt.s32.f32 %v795
        %v924 = vcvt.s32.f32 %v796
        %v925 = vcvt.s32.f32 %v797
        %v926 = vcvt.s32.f32 %v798
        %v927 = vcvt.s32.f32 %v799
        %v928 = vcvt.s32.f32 %v800
        %v929 = vcvt.s32.f32 %v801
        %v930 = vcvt.s32.f32 %v802
        %v931 = vcvt.s32.f32 %v803
        %v932 = vcvt.s32.f32 %v804
        %v933 = vcvt.s32.f32 %v805
        %v934 = vcvt.s32.f32 %v806
        %v935 = vcvt.s32.f32 %v807
        %v936 = vcvt.s32.f32 %v808
        %v937 = vcvt.s32.f32 %v809
        %v938 = vcvt.s32.f32 %v810
        %v939 = vcvt.s32.f32 %v811
        %v940 = vcvt.s32.f32 %v812
        %v941 = vld [vmem:[%s2] sm:$0xff]
        %v942 = vld [vmem:[%s2 + $0x8] sm:$0xff]
        %v943 = vld [vmem:[%s2 + $0x10] sm:$0xff]
        %v944 = vld [vmem:[%s2 + $0x18] sm:$0xff]
        %v945 = vld [vmem:[%s2 + $0x20] sm:$0xff]
        %v946 = vld [vmem:[%s2 + $0x28] sm:$0xff]
        %v947 = vld [vmem:[%s2 + $0x30] sm:$0xff]
        %v948 = vld [vmem:[%s2 + $0x38] sm:$0xff]
        %v949 = vld [vmem:[%s2 + $0x40] sm:$0xff]
        %v950 = vld [vmem:[%s2 + $0x48] sm:$0xff]
        %v951 = vld [vmem:[%s2 + $0x50] sm:$0xff]
        %v952 = vld [vmem:[%s2 + $0x58] sm:$0xff]
        %v953 = vld [vmem:[%s2 + $0x60] sm:$0xff]
        %v954 = vld [vmem:[%s2 + $0x68] sm:$0xff]
        %v955 = vld [vmem:[%s2 + $0x70] sm:$0xff]
        %v956 = vld [vmem:[%s2 + $0x78] sm:$0xff]
        %v957 = vld [vmem:[%s2 + $0x80] sm:$0xff]
        %v958 = vld [vmem:[%s2 + $0x88] sm:$0xff]
        %v959 = vld [vmem:[%s2 + $0x90] sm:$0xff]
        %v960 = vld [vmem:[%s2 + $0x98] sm:$0xff]
        %v961 = vld [vmem:[%s2 + $0xa0] sm:$0xff]
        %v962 = vld [vmem:[%s2 + $0xa8] sm:$0xff]
        %v963 = vld [vmem:[%s2 + $0xb0] sm:$0xff]
        %v964 = vld [vmem:[%s2 + $0xb8] sm:$0xff]
        %vm965 = vcmask 523264
        %v967 = vsel %vm965, %v814, 0
        %v970 = vsel %vm965, %v816, 0
        %v973 = vsel %vm965, %v818, 0
        %v976 = vsel %vm965, %v820, 0
        %v979 = vsel %vm965, %v822, 0
        %v982 = vsel %vm965, %v824, 0
        %v985 = vsel %vm965, %v826, 0
        %v988 = vsel %vm965, %v828, 0
        %v991 = vsel %vm965, %v830, 0
        %v994 = vsel %vm965, %v832, 0
        %v997 = vsel %vm965, %v834, 0
        %v1000 = vsel %vm965, %v836, 0
        %v1003 = vsel %vm965, %v838, 0
        %v1006 = vsel %vm965, %v840, 0
        %v1009 = vsel %vm965, %v842, 0
        %v1012 = vsel %vm965, %v844, 0
        %v1015 = vsel %vm965, %v846, 0
        %v1018 = vsel %vm965, %v848, 0
        %v1021 = vsel %vm965, %v850, 0
        %v1024 = vsel %vm965, %v852, 0
        %v1027 = vsel %vm965, %v854, 0
        %v1030 = vsel %vm965, %v856, 0
        %v1033 = vsel %vm965, %v858, 0
        %v1036 = vsel %vm965, %v860, 0
        %v1039 = vsel %vm965, %v862, 0
        %v1042 = vsel %vm965, %v864, 0
        %v1045 = vsel %vm965, %v866, 0
        %v1048 = vsel %vm965, %v868, 0
        %v1051 = vsel %vm965, %v870, 0
        %v1054 = vsel %vm965, %v872, 0
        %v1057 = vsel %vm965, %v874, 0
        %v1060 = vsel %vm965, %v876, 0
        %v1063 = vsel %vm965, %v878, 0
        %v1066 = vsel %vm965, %v880, 0
        %v1069 = vsel %vm965, %v882, 0
        %v1072 = vsel %vm965, %v884, 0
        %v1075 = vsel %vm965, %v886, 0
        %v1078 = vsel %vm965, %v888, 0
        %v1081 = vsel %vm965, %v890, 0
        %v1084 = vsel %vm965, %v892, 0
        %v1087 = vsel %vm965, %v894, 0
        %v1090 = vsel %vm965, %v896, 0
        %v1093 = vsel %vm965, %v898, 0
        %v1096 = vsel %vm965, %v900, 0
        %v1099 = vsel %vm965, %v902, 0
        %v1102 = vsel %vm965, %v904, 0
        %v1105 = vsel %vm965, %v906, 0
        %v1108 = vsel %vm965, %v908, 0
        %v1111 = vsel %vm965, %v910, 0
        %v1114 = vsel %vm965, %v912, 0
        %v1117 = vsel %vm965, %v914, 0
        %v1120 = vsel %vm965, %v916, 0
        %v1123 = vsel %vm965, %v918, 0
        %v1126 = vsel %vm965, %v920, 0
        %v1129 = vsel %vm965, %v922, 0
        %v1132 = vsel %vm965, %v924, 0
        %v1135 = vsel %vm965, %v926, 0
        %v1138 = vsel %vm965, %v928, 0
        %v1141 = vsel %vm965, %v930, 0
        %v1144 = vsel %vm965, %v932, 0
        %v1147 = vsel %vm965, %v934, 0
        %v1150 = vsel %vm965, %v936, 0
        %v1153 = vsel %vm965, %v938, 0
        %v1156 = vsel %vm965, %v940, 0
        %1158 = vmatprep.subr.mxu0 0.0
        %1159 = vmatpush1.msra.mxu0 %v941
        %1160 = vmatprep.subr.mxu0 0.0
        %1161 = vmatpush1.msra.mxu0 %v942
        %1162 = vmatprep.subr.mxu0 0.0
        %1163 = vmatpush1.msra.mxu0 %v943
        %1164 = vmatprep.subr.mxu0 0.0
        %1165 = vmatpush1.msra.mxu0 %v944
        %1166 = vmatprep.subr.mxu0 0.0
        %1167 = vmatpush1.msra.mxu0 %v945
        %1168 = vmatprep.subr.mxu0 0.0
        %1169 = vmatpush1.msra.mxu0 %v946
        %1170 = vmatprep.subr.mxu0 0.0
        %1171 = vmatpush1.msra.mxu0 %v947
        %1172 = vmatprep.subr.mxu0 0.0
        %1173 = vmatpush1.msra.mxu0 %v948
        %1174 = vmatprep.subr.mxu0 0.0
        %1175 = vmatpush1.msra.mxu0 %v949
        %1176 = vmatprep.subr.mxu0 0.0
        %1177 = vmatpush1.msra.mxu0 %v950
        %1178 = vmatprep.subr.mxu0 0.0
        %1179 = vmatpush1.msra.mxu0 %v951
        %1180 = vmatprep.subr.mxu0 0.0
        %1181 = vmatpush1.msra.mxu0 %v952
        %1182 = vmatprep.subr.mxu0 0.0
        %1183 = vmatpush1.msra.mxu0 %v953
        %1184 = vmatprep.subr.mxu0 0.0
        %1185 = vmatpush1.msra.mxu0 %v954
        %1186 = vmatprep.subr.mxu0 0.0
        %1187 = vmatpush1.msra.mxu0 %v955
        %1188 = vmatprep.subr.mxu0 0.0
        %1189 = vmatpush1.msra.mxu0 %v956
        %1190 = vmatprep.subr.mxu0 0.0
        %1191 = vmatpush1.msra.mxu0 %v957
        %1192 = vmatprep.subr.mxu0 0.0
        %1193 = vmatpush1.msra.mxu0 %v958
        %1194 = vmatprep.subr.mxu0 0.0
        %1195 = vmatpush1.msra.mxu0 %v959
        %1196 = vmatprep.subr.mxu0 0.0
        %1197 = vmatpush1.msra.mxu0 %v960
        %1198 = vmatprep.subr.mxu0 0.0
        %1199 = vmatpush1.msra.mxu0 %v961
        %1200 = vmatprep.subr.mxu0 0.0
        %1201 = vmatpush1.msra.mxu0 %v962
        %1202 = vmatprep.subr.mxu0 0.0
        %1203 = vmatpush1.msra.mxu0 %v963
        %1204 = vmatprep.subr.mxu0 0.0
        %1205 = vmatpush1.msra.mxu0 %v964
        %1206 = vmatprep.subr.mxu0 0.0
        %1207 = vmatpush1.msra.mxu0 0.0
        %1208 = vmatprep.subr.mxu0 0.0
        %1209 = vmatpush1.msra.mxu0 0.0
        %1210 = vmatprep.subr.mxu0 0.0
        %1211 = vmatpush1.msra.mxu0 0.0
        %1212 = vmatprep.subr.mxu0 0.0
        %1213 = vmatpush1.msra.mxu0 0.0
        %1214 = vmatprep.subr.mxu0 0.0
        %1215 = vmatpush1.msra.mxu0 0.0
        %1216 = vmatprep.subr.mxu0 0.0
        %1217 = vmatpush1.msra.mxu0 0.0
        %1218 = vmatprep.subr.mxu0 0.0
        %1219 = vmatpush1.msra.mxu0 0.0
        %1220 = vmatprep.subr.mxu0 0.0
        %1221 = vmatpush1.msra.mxu0 0.0
        %1222 = vmatprep.mubr.f32.mxu0 %v967
        %1223 = vmatmul.mubr.f32.gmra.mrb[0].mxu0 %v813
        %v1224 = vpop.f32.mrb[0].mxu0
        %v1225 = vadd.f32 0.0, %v1224
        %v1226 = vpop.f32.mrb[0].mxu0
        %1227 = vmatprep.mubr.f32.mxu0 %v970
        %1228 = vmatmul.mubr.f32.gmra.mrb[0].mxu0 %v815
        %v1229 = vpop.f32.mrb[0].mxu0
        %v1230 = vadd.f32 0.0, %v1229
        %v1231 = vpop.f32.mrb[0].mxu0
        %1232 = vmatprep.mubr.f32.mxu0 %v973
        %1233 = vmatmul.mubr.f32.gmra.mrb[0].mxu0 %v817
        %v1234 = vpop.f32.mrb[0].mxu0
        %v1235 = vadd.f32 0.0, %v1234
        %v1236 = vpop.f32.mrb[0].mxu0
        %1237 = vmatprep.mubr.f32.mxu0 %v976
        %1238 = vmatmul.mubr.f32.gmra.mrb[0].mxu0 %v819
        %v1239 = vpop.f32.mrb[0].mxu0
        %v1240 = vadd.f32 0.0, %v1239
        %v1241 = vpop.f32.mrb[0].mxu0
        %1242 = vmatprep.mubr.f32.mxu0 %v979
        %1243 = vmatmul.mubr.f32.gmra.mrb[0].mxu0 %v821
        %v1244 = vpop.f32.mrb[0].mxu0
        %v1245 = vadd.f32 0.0, %v1244
        %v1246 = vpop.f32.mrb[0].mxu0
        %1247 = vmatprep.mubr.f32.mxu0 %v982
        %1248 = vmatmul.mubr.f32.gmra.mrb[0].mxu0 %v823
        %v1249 = vpop.f32.mrb[0].mxu0
        %v1250 = vadd.f32 0.0, %v1249
        %v1251 = vpop.f32.mrb[0].mxu0
        %1252 = vmatprep.mubr.f32.mxu0 %v985
        %1253 = vmatmul.mubr.f32.gmra.mrb[0].mxu0 %v825
        %v1254 = vpop.f32.mrb[0].mxu0
        %v1255 = vadd.f32 0.0, %v1254
        %v1256 = vpop.f32.mrb[0].mxu0
        %1257 = vmatprep.mubr.f32.mxu0 %v988
        %1258 = vmatmul.mubr.f32.gmra.mrb[0].mxu0 %v827
        %v1259 = vpop.f32.mrb[0].mxu0
        %v1260 = vadd.f32 0.0, %v1259
        %v1261 = vpop.f32.mrb[0].mxu0
        %1262 = vmatprep.mubr.f32.mxu0 %v991
        %1263 = vmatmul.mubr.f32.gmra.mrb[0].mxu0 %v829
        %v1264 = vpop.f32.mrb[0].mxu0
        %v1265 = vadd.f32 0.0, %v1264
        %v1266 = vpop.f32.mrb[0].mxu0
        %1267 = vmatprep.mubr.f32.mxu0 %v994
        %1268 = vmatmul.mubr.f32.gmra.mrb[0].mxu0 %v831
        %v1269 = vpop.f32.mrb[0].mxu0
        %v1270 = vadd.f32 0.0, %v1269
        %v1271 = vpop.f32.mrb[0].mxu0
        %1272 = vmatprep.mubr.f32.mxu0 %v997
        %1273 = vmatmul.mubr.f32.gmra.mrb[0].mxu0 %v833
        %v1274 = vpop.f32.mrb[0].mxu0
        %v1275 = vadd.f32 0.0, %v1274
        %v1276 = vpop.f32.mrb[0].mxu0
        %1277 = vmatprep.mubr.f32.mxu0 %v1000
        %1278 = vmatmul.mubr.f32.gmra.mrb[0].mxu0 %v835
        %v1279 = vpop.f32.mrb[0].mxu0
        %v1280 = vadd.f32 0.0, %v1279
        %v1281 = vpop.f32.mrb[0].mxu0
        %1282 = vmatprep.mubr.f32.mxu0 %v1003
        %1283 = vmatmul.mubr.f32.gmra.mrb[0].mxu0 %v837
        %v1284 = vpop.f32.mrb[0].mxu0
        %v1285 = vadd.f32 0.0, %v1284
        %v1286 = vpop.f32.mrb[0].mxu0
        %1287 = vmatprep.mubr.f32.mxu0 %v1006
        %1288 = vmatmul.mubr.f32.gmra.mrb[0].mxu0 %v839
        %v1289 = vpop.f32.mrb[0].mxu0
        %v1290 = vadd.f32 0.0, %v1289
        %v1291 = vpop.f32.mrb[0].mxu0
        %1292 = vmatprep.mubr.f32.mxu0 %v1009
        %1293 = vmatmul.mubr.f32.gmra.mrb[0].mxu0 %v841
        %v1294 = vpop.f32.mrb[0].mxu0
        %v1295 = vadd.f32 0.0, %v1294
        %v1296 = vpop.f32.mrb[0].mxu0
        %1297 = vmatprep.mubr.f32.mxu0 %v1012
        %1298 = vmatmul.mubr.f32.gmra.mrb[0].mxu0 %v843
        %v1299 = vpop.f32.mrb[0].mxu0
        %v1300 = vadd.f32 0.0, %v1299
        %v1301 = vpop.f32.mrb[0].mxu0
        %1302 = vmatprep.mubr.f32.mxu0 %v1015
        %1303 = vmatmul.mubr.f32.gmra.mrb[0].mxu0 %v845
        %v1304 = vpop.f32.mrb[0].mxu0
        %v1305 = vadd.f32 0.0, %v1304
        %v1306 = vpop.f32.mrb[0].mxu0
        %1307 = vmatprep.mubr.f32.mxu0 %v1018
        %1308 = vmatmul.mubr.f32.gmra.mrb[0].mxu0 %v847
        %v1309 = vpop.f32.mrb[0].mxu0
        %v1310 = vadd.f32 0.0, %v1309
        %v1311 = vpop.f32.mrb[0].mxu0
        %1312 = vmatprep.mubr.f32.mxu0 %v1021
        %1313 = vmatmul.mubr.f32.gmra.mrb[0].mxu0 %v849
        %v1314 = vpop.f32.mrb[0].mxu0
        %v1315 = vadd.f32 0.0, %v1314
        %v1316 = vpop.f32.mrb[0].mxu0
        %1317 = vmatprep.mubr.f32.mxu0 %v1024
        %1318 = vmatmul.mubr.f32.gmra.mrb[0].mxu0 %v851
        %v1319 = vpop.f32.mrb[0].mxu0
        %v1320 = vadd.f32 0.0, %v1319
        %v1321 = vpop.f32.mrb[0].mxu0
        %1322 = vmatprep.mubr.f32.mxu0 %v1027
        %1323 = vmatmul.mubr.f32.gmra.mrb[0].mxu0 %v853
        %v1324 = vpop.f32.mrb[0].mxu0
        %v1325 = vadd.f32 0.0, %v1324
        %v1326 = vpop.f32.mrb[0].mxu0
        %1327 = vmatprep.mubr.f32.mxu0 %v1030
        %1328 = vmatmul.mubr.f32.gmra.mrb[0].mxu0 %v855
        %v1329 = vpop.f32.mrb[0].mxu0
        %v1330 = vadd.f32 0.0, %v1329
        %v1331 = vpop.f32.mrb[0].mxu0
        %1332 = vmatprep.mubr.f32.mxu0 %v1033
        %1333 = vmatmul.mubr.f32.gmra.mrb[0].mxu0 %v857
        %v1334 = vpop.f32.mrb[0].mxu0
        %v1335 = vadd.f32 0.0, %v1334
        %v1336 = vpop.f32.mrb[0].mxu0
        %1337 = vmatprep.mubr.f32.mxu0 %v1036
        %1338 = vmatmul.mubr.f32.gmra.mrb[0].mxu0 %v859
        %v1339 = vpop.f32.mrb[0].mxu0
        %v1340 = vadd.f32 0.0, %v1339
        %v1341 = vpop.f32.mrb[0].mxu0
        %1342 = vmatprep.mubr.f32.mxu0 %v1039
        %1343 = vmatmul.mubr.f32.gmra.mrb[0].mxu0 %v861
        %v1344 = vpop.f32.mrb[0].mxu0
        %v1345 = vadd.f32 0.0, %v1344
        %v1346 = vpop.f32.mrb[0].mxu0
        %1347 = vmatprep.mubr.f32.mxu0 %v1042
        %1348 = vmatmul.mubr.f32.gmra.mrb[0].mxu0 %v863
        %v1349 = vpop.f32.mrb[0].mxu0
        %v1350 = vadd.f32 0.0, %v1349
        %v1351 = vpop.f32.mrb[0].mxu0
        %1352 = vmatprep.mubr.f32.mxu0 %v1045
        %1353 = vmatmul.mubr.f32.gmra.mrb[0].mxu0 %v865
        %v1354 = vpop.f32.mrb[0].mxu0
        %v1355 = vadd.f32 0.0, %v1354
        %v1356 = vpop.f32.mrb[0].mxu0
        %1357 = vmatprep.mubr.f32.mxu0 %v1048
        %1358 = vmatmul.mubr.f32.gmra.mrb[0].mxu0 %v867
        %v1359 = vpop.f32.mrb[0].mxu0
        %v1360 = vadd.f32 0.0, %v1359
        %v1361 = vpop.f32.mrb[0].mxu0
        %1362 = vmatprep.mubr.f32.mxu0 %v1051
        %1363 = vmatmul.mubr.f32.gmra.mrb[0].mxu0 %v869
        %v1364 = vpop.f32.mrb[0].mxu0
        %v1365 = vadd.f32 0.0, %v1364
        %v1366 = vpop.f32.mrb[0].mxu0
        %1367 = vmatprep.mubr.f32.mxu0 %v1054
        %1368 = vmatmul.mubr.f32.gmra.mrb[0].mxu0 %v871
        %v1369 = vpop.f32.mrb[0].mxu0
        %v1370 = vadd.f32 0.0, %v1369
        %v1371 = vpop.f32.mrb[0].mxu0
        %1372 = vmatprep.mubr.f32.mxu0 %v1057
        %1373 = vmatmul.mubr.f32.gmra.mrb[0].mxu0 %v873
        %v1374 = vpop.f32.mrb[0].mxu0
        %v1375 = vadd.f32 0.0, %v1374
        %v1376 = vpop.f32.mrb[0].mxu0
        %1377 = vmatprep.mubr.f32.mxu0 %v1060
        %1378 = vmatmul.mubr.f32.gmra.mrb[0].mxu0 %v875
        %v1379 = vpop.f32.mrb[0].mxu0
        %v1380 = vadd.f32 0.0, %v1379
        %v1381 = vpop.f32.mrb[0].mxu0
        %1382 = vmatprep.mubr.f32.mxu0 %v1063
        %1383 = vmatmul.mubr.f32.gmra.mrb[0].mxu0 %v877
        %v1384 = vpop.f32.mrb[0].mxu0
        %v1385 = vadd.f32 0.0, %v1384
        %v1386 = vpop.f32.mrb[0].mxu0
        %1387 = vmatprep.mubr.f32.mxu0 %v1066
        %1388 = vmatmul.mubr.f32.gmra.mrb[0].mxu0 %v879
        %v1389 = vpop.f32.mrb[0].mxu0
        %v1390 = vadd.f32 0.0, %v1389
        %v1391 = vpop.f32.mrb[0].mxu0
        %1392 = vmatprep.mubr.f32.mxu0 %v1069
        %1393 = vmatmul.mubr.f32.gmra.mrb[0].mxu0 %v881
        %v1394 = vpop.f32.mrb[0].mxu0
        %v1395 = vadd.f32 0.0, %v1394
        %v1396 = vpop.f32.mrb[0].mxu0
        %1397 = vmatprep.mubr.f32.mxu0 %v1072
        %1398 = vmatmul.mubr.f32.gmra.mrb[0].mxu0 %v883
        %v1399 = vpop.f32.mrb[0].mxu0
        %v1400 = vadd.f32 0.0, %v1399
        %v1401 = vpop.f32.mrb[0].mxu0
        %1402 = vmatprep.mubr.f32.mxu0 %v1075
        %1403 = vmatmul.mubr.f32.gmra.mrb[0].mxu0 %v885
        %v1404 = vpop.f32.mrb[0].mxu0
        %v1405 = vadd.f32 0.0, %v1404
        %v1406 = vpop.f32.mrb[0].mxu0
        %1407 = vmatprep.mubr.f32.mxu0 %v1078
        %1408 = vmatmul.mubr.f32.gmra.mrb[0].mxu0 %v887
        %v1409 = vpop.f32.mrb[0].mxu0
        %v1410 = vadd.f32 0.0, %v1409
        %v1411 = vpop.f32.mrb[0].mxu0
        %1412 = vmatprep.mubr.f32.mxu0 %v1081
        %1413 = vmatmul.mubr.f32.gmra.mrb[0].mxu0 %v889
        %v1414 = vpop.f32.mrb[0].mxu0
        %v1415 = vadd.f32 0.0, %v1414
        %v1416 = vpop.f32.mrb[0].mxu0
        %1417 = vmatprep.mubr.f32.mxu0 %v1084
        %1418 = vmatmul.mubr.f32.gmra.mrb[0].mxu0 %v891
        %v1419 = vpop.f32.mrb[0].mxu0
        %v1420 = vadd.f32 0.0, %v1419
        %v1421 = vpop.f32.mrb[0].mxu0
        %1422 = vmatprep.mubr.f32.mxu0 %v1087
        %1423 = vmatmul.mubr.f32.gmra.mrb[0].mxu0 %v893
        %v1424 = vpop.f32.mrb[0].mxu0
        %v1425 = vadd.f32 0.0, %v1424
        %v1426 = vpop.f32.mrb[0].mxu0
        %1427 = vmatprep.mubr.f32.mxu0 %v1090
        %1428 = vmatmul.mubr.f32.gmra.mrb[0].mxu0 %v895
        %v1429 = vpop.f32.mrb[0].mxu0
        %v1430 = vadd.f32 0.0, %v1429
        %v1431 = vpop.f32.mrb[0].mxu0
        %1432 = vmatprep.mubr.f32.mxu0 %v1093
        %1433 = vmatmul.mubr.f32.gmra.mrb[0].mxu0 %v897
        %v1434 = vpop.f32.mrb[0].mxu0
        %v1435 = vadd.f32 0.0, %v1434
        %v1436 = vpop.f32.mrb[0].mxu0
        %1437 = vmatprep.mubr.f32.mxu0 %v1096
        %1438 = vmatmul.mubr.f32.gmra.mrb[0].mxu0 %v899
        %v1439 = vpop.f32.mrb[0].mxu0
        %v1440 = vadd.f32 0.0, %v1439
        %v1441 = vpop.f32.mrb[0].mxu0
        %1442 = vmatprep.mubr.f32.mxu0 %v1099
        %1443 = vmatmul.mubr.f32.gmra.mrb[0].mxu0 %v901
        %v1444 = vpop.f32.mrb[0].mxu0
        %v1445 = vadd.f32 0.0, %v1444
        %v1446 = vpop.f32.mrb[0].mxu0
        %1447 = vmatprep.mubr.f32.mxu0 %v1102
        %1448 = vmatmul.mubr.f32.gmra.mrb[0].mxu0 %v903
        %v1449 = vpop.f32.mrb[0].mxu0
        %v1450 = vadd.f32 0.0, %v1449
        %v1451 = vpop.f32.mrb[0].mxu0
        %1452 = vmatprep.mubr.f32.mxu0 %v1105
        %1453 = vmatmul.mubr.f32.gmra.mrb[0].mxu0 %v905
        %v1454 = vpop.f32.mrb[0].mxu0
        %v1455 = vadd.f32 0.0, %v1454
        %v1456 = vpop.f32.mrb[0].mxu0
        %1457 = vmatprep.mubr.f32.mxu0 %v1108
        %1458 = vmatmul.mubr.f32.gmra.mrb[0].mxu0 %v907
        %v1459 = vpop.f32.mrb[0].mxu0
        %v1460 = vadd.f32 0.0, %v1459
        %v1461 = vpop.f32.mrb[0].mxu0
        %1462 = vmatprep.mubr.f32.mxu0 %v1111
        %1463 = vmatmul.mubr.f32.gmra.mrb[0].mxu0 %v909
        %v1464 = vpop.f32.mrb[0].mxu0
        %v1465 = vadd.f32 0.0, %v1464
        %v1466 = vpop.f32.mrb[0].mxu0
        %1467 = vmatprep.mubr.f32.mxu0 %v1114
        %1468 = vmatmul.mubr.f32.gmra.mrb[0].mxu0 %v911
        %v1469 = vpop.f32.mrb[0].mxu0
        %v1470 = vadd.f32 0.0, %v1469
        %v1471 = vpop.f32.mrb[0].mxu0
        %1472 = vmatprep.mubr.f32.mxu0 %v1117
        %1473 = vmatmul.mubr.f32.gmra.mrb[0].mxu0 %v913
        %v1474 = vpop.f32.mrb[0].mxu0
        %v1475 = vadd.f32 0.0, %v1474
        %v1476 = vpop.f32.mrb[0].mxu0
        %1477 = vmatprep.mubr.f32.mxu0 %v1120
        %1478 = vmatmul.mubr.f32.gmra.mrb[0].mxu0 %v915
        %v1479 = vpop.f32.mrb[0].mxu0
        %v1480 = vadd.f32 0.0, %v1479
        %v1481 = vpop.f32.mrb[0].mxu0
        %1482 = vmatprep.mubr.f32.mxu0 %v1123
        %1483 = vmatmul.mubr.f32.gmra.mrb[0].mxu0 %v917
        %v1484 = vpop.f32.mrb[0].mxu0
        %v1485 = vadd.f32 0.0, %v1484
        %v1486 = vpop.f32.mrb[0].mxu0
        %1487 = vmatprep.mubr.f32.mxu0 %v1126
        %1488 = vmatmul.mubr.f32.gmra.mrb[0].mxu0 %v919
        %v1489 = vpop.f32.mrb[0].mxu0
        %v1490 = vadd.f32 0.0, %v1489
        %v1491 = vpop.f32.mrb[0].mxu0
        %1492 = vmatprep.mubr.f32.mxu0 %v1129
        %1493 = vmatmul.mubr.f32.gmra.mrb[0].mxu0 %v921
        %v1494 = vpop.f32.mrb[0].mxu0
        %v1495 = vadd.f32 0.0, %v1494
        %v1496 = vpop.f32.mrb[0].mxu0
        %1497 = vmatprep.mubr.f32.mxu0 %v1132
        %1498 = vmatmul.mubr.f32.gmra.mrb[0].mxu0 %v923
        %v1499 = vpop.f32.mrb[0].mxu0
        %v1500 = vadd.f32 0.0, %v1499
        %v1501 = vpop.f32.mrb[0].mxu0
        %1502 = vmatprep.mubr.f32.mxu0 %v1135
        %1503 = vmatmul.mubr.f32.gmra.mrb[0].mxu0 %v925
        %v1504 = vpop.f32.mrb[0].mxu0
        %v1505 = vadd.f32 0.0, %v1504
        %v1506 = vpop.f32.mrb[0].mxu0
        %1507 = vmatprep.mubr.f32.mxu0 %v1138
        %1508 = vmatmul.mubr.f32.gmra.mrb[0].mxu0 %v927
        %v1509 = vpop.f32.mrb[0].mxu0
        %v1510 = vadd.f32 0.0, %v1509
        %v1511 = vpop.f32.mrb[0].mxu0
        %1512 = vmatprep.mubr.f32.mxu0 %v1141
        %1513 = vmatmul.mubr.f32.gmra.mrb[0].mxu0 %v929
        %v1514 = vpop.f32.mrb[0].mxu0
        %v1515 = vadd.f32 0.0, %v1514
        %v1516 = vpop.f32.mrb[0].mxu0
        %1517 = vmatprep.mubr.f32.mxu0 %v1144
        %1518 = vmatmul.mubr.f32.gmra.mrb[0].mxu0 %v931
        %v1519 = vpop.f32.mrb[0].mxu0
        %v1520 = vadd.f32 0.0, %v1519
        %v1521 = vpop.f32.mrb[0].mxu0
        %1522 = vmatprep.mubr.f32.mxu0 %v1147
        %1523 = vmatmul.mubr.f32.gmra.mrb[0].mxu0 %v933
        %v1524 = vpop.f32.mrb[0].mxu0
        %v1525 = vadd.f32 0.0, %v1524
        %v1526 = vpop.f32.mrb[0].mxu0
        %1527 = vmatprep.mubr.f32.mxu0 %v1150
        %1528 = vmatmul.mubr.f32.gmra.mrb[0].mxu0 %v935
        %v1529 = vpop.f32.mrb[0].mxu0
        %v1530 = vadd.f32 0.0, %v1529
        %v1531 = vpop.f32.mrb[0].mxu0
        %1532 = vmatprep.mubr.f32.mxu0 %v1153
        %1533 = vmatmul.mubr.f32.gmra.mrb[0].mxu0 %v937
        %v1534 = vpop.f32.mrb[0].mxu0
        %v1535 = vadd.f32 0.0, %v1534
        %v1536 = vpop.f32.mrb[0].mxu0
        %1537 = vmatprep.mubr.f32.mxu0 %v1156
        %1538 = vmatmul.mubr.f32.gmra.mrb[0].mxu0 %v939
        %v1539 = vpop.f32.mrb[0].mxu0
        %v1540 = vadd.f32 0.0, %v1539
        %v1541 = vpop.f32.mrb[0].mxu0
        %1542 = vdwg.mxu0
        %v1543 = vmul.f32 %v234, 11.313708
        %v1544 = vmul.f32 %v235, 11.313708
        %v1545 = vmul.f32 %v236, 11.313708
        %v1546 = vmul.f32 %v237, 11.313708
        %v1547 = vmul.f32 %v238, 11.313708
        %v1548 = vmul.f32 %v239, 11.313708
        %v1549 = vmul.f32 %v240, 11.313708
        %v1550 = vmul.f32 %v241, 11.313708
        %v1551 = vmul.f32 %v242, 11.313708
        %v1552 = vmul.f32 %v243, 11.313708
        %v1553 = vmul.f32 %v244, 11.313708
        %v1554 = vmul.f32 %v245, 11.313708
        %v1555 = vmul.f32 %v246, 11.313708
        %v1556 = vmul.f32 %v247, 11.313708
        %v1557 = vmul.f32 %v248, 11.313708
        %v1558 = vmul.f32 %v249, 11.313708
        %v1559 = vmul.f32 %v250, 11.313708
        %v1560 = vmul.f32 %v251, 11.313708
        %v1561 = vmul.f32 %v252, 11.313708
        %v1562 = vmul.f32 %v253, 11.313708
        %v1563 = vmul.f32 %v254, 11.313708
        %v1564 = vmul.f32 %v255, 11.313708
        %v1565 = vmul.f32 %v256, 11.313708
        %v1566 = vmul.f32 %v257, 11.313708
        %v1567 = vmul.f32 %v258, 11.313708
        %v1568 = vmul.f32 %v259, 11.313708
        %v1569 = vmul.f32 %v260, 11.313708
        %v1570 = vmul.f32 %v261, 11.313708
        %v1571 = vmul.f32 %v262, 11.313708
        %v1572 = vmul.f32 %v263, 11.313708
        %v1573 = vmul.f32 %v264, 11.313708
        %v1574 = vmul.f32 %v265, 11.313708
        %v1575 = vmul.f32 %v266, 11.313708
        %v1576 = vmul.f32 %v267, 11.313708
        %v1577 = vmul.f32 %v268, 11.313708
        %v1578 = vmul.f32 %v269, 11.313708
        %v1579 = vmul.f32 %v270, 11.313708
        %v1580 = vmul.f32 %v271, 11.313708
        %v1581 = vmul.f32 %v272, 11.313708
        %v1582 = vmul.f32 %v273, 11.313708
        %v1583 = vmul.f32 %v274, 11.313708
        %v1584 = vmul.f32 %v275, 11.313708
        %v1585 = vmul.f32 %v276, 11.313708
        %v1586 = vmul.f32 %v277, 11.313708
        %v1587 = vmul.f32 %v278, 11.313708
        %v1588 = vmul.f32 %v279, 11.313708
        %v1589 = vmul.f32 %v280, 11.313708
        %v1590 = vmul.f32 %v281, 11.313708
        %v1591 = vmul.f32 %v282, 11.313708
        %v1592 = vmul.f32 %v283, 11.313708
        %v1593 = vmul.f32 %v284, 11.313708
        %v1594 = vmul.f32 %v285, 11.313708
        %v1595 = vmul.f32 %v286, 11.313708
        %v1596 = vmul.f32 %v287, 11.313708
        %v1597 = vmul.f32 %v288, 11.313708
        %v1598 = vmul.f32 %v289, 11.313708
        %v1599 = vmul.f32 %v290, 11.313708
        %v1600 = vmul.f32 %v291, 11.313708
        %v1601 = vmul.f32 %v292, 11.313708
        %v1602 = vmul.f32 %v293, 11.313708
        %v1603 = vmul.f32 %v294, 11.313708
        %v1604 = vmul.f32 %v295, 11.313708
        %v1605 = vmul.f32 %v296, 11.313708
        %v1606 = vmul.f32 %v297, 11.313708
        %v1607 = vadd.f32 %v1543, %v1225
        %v1608 = vadd.f32 %v1544, %v1230
        %v1609 = vadd.f32 %v1545, %v1235
        %v1610 = vadd.f32 %v1546, %v1240
        %v1611 = vadd.f32 %v1547, %v1245
        %v1612 = vadd.f32 %v1548, %v1250
        %v1613 = vadd.f32 %v1549, %v1255
        %v1614 = vadd.f32 %v1550, %v1260
        %v1615 = vadd.f32 %v1551, %v1265
        %v1616 = vadd.f32 %v1552, %v1270
        %v1617 = vadd.f32 %v1553, %v1275
        %v1618 = vadd.f32 %v1554, %v1280
        %v1619 = vadd.f32 %v1555, %v1285
        %v1620 = vadd.f32 %v1556, %v1290
        %v1621 = vadd.f32 %v1557, %v1295
        %v1622 = vadd.f32 %v1558, %v1300
        %v1623 = vadd.f32 %v1559, %v1305
        %v1624 = vadd.f32 %v1560, %v1310
        %v1625 = vadd.f32 %v1561, %v1315
        %v1626 = vadd.f32 %v1562, %v1320
        %v1627 = vadd.f32 %v1563, %v1325
        %v1628 = vadd.f32 %v1564, %v1330
        %v1629 = vadd.f32 %v1565, %v1335
        %v1630 = vadd.f32 %v1566, %v1340
        %v1631 = vadd.f32 %v1567, %v1345
        %v1632 = vadd.f32 %v1568, %v1350
        %v1633 = vadd.f32 %v1569, %v1355
        %v1634 = vadd.f32 %v1570, %v1360
        %v1635 = vadd.f32 %v1571, %v1365
        %v1636 = vadd.f32 %v1572, %v1370
        %v1637 = vadd.f32 %v1573, %v1375
        %v1638 = vadd.f32 %v1574, %v1380
        %v1639 = vadd.f32 %v1575, %v1385
        %v1640 = vadd.f32 %v1576, %v1390
        %v1641 = vadd.f32 %v1577, %v1395
        %v1642 = vadd.f32 %v1578, %v1400
        %v1643 = vadd.f32 %v1579, %v1405
        %v1644 = vadd.f32 %v1580, %v1410
        %v1645 = vadd.f32 %v1581, %v1415
        %v1646 = vadd.f32 %v1582, %v1420
        %v1647 = vadd.f32 %v1583, %v1425
        %v1648 = vadd.f32 %v1584, %v1430
        %v1649 = vadd.f32 %v1585, %v1435
        %v1650 = vadd.f32 %v1586, %v1440
        %v1651 = vadd.f32 %v1587, %v1445
        %v1652 = vadd.f32 %v1588, %v1450
        %v1653 = vadd.f32 %v1589, %v1455
        %v1654 = vadd.f32 %v1590, %v1460
        %v1655 = vadd.f32 %v1591, %v1465
        %v1656 = vadd.f32 %v1592, %v1470
        %v1657 = vadd.f32 %v1593, %v1475
        %v1658 = vadd.f32 %v1594, %v1480
        %v1659 = vadd.f32 %v1595, %v1485
        %v1660 = vadd.f32 %v1596, %v1490
        %v1661 = vadd.f32 %v1597, %v1495
        %v1662 = vadd.f32 %v1598, %v1500
        %v1663 = vadd.f32 %v1599, %v1505
        %v1664 = vadd.f32 %v1600, %v1510
        %v1665 = vadd.f32 %v1601, %v1515
        %v1666 = vadd.f32 %v1602, %v1520
        %v1667 = vadd.f32 %v1603, %v1525
        %v1668 = vadd.f32 %v1604, %v1530
        %v1669 = vadd.f32 %v1605, %v1535
        %v1670 = vadd.f32 %v1606, %v1540
        %1671 = vst [vmem:[%s200] sm:$0xff] %v1607
        %1672 = vst [vmem:[%s200 + $0x8] sm:$0xff] %v1608
        %1673 = vst [vmem:[%s200 + $0x10] sm:$0xff] %v1609
        %1674 = vst [vmem:[%s200 + $0x18] sm:$0xff] %v1610
        %1675 = vst [vmem:[%s200 + $0x20] sm:$0xff] %v1611
        %1676 = vst [vmem:[%s200 + $0x28] sm:$0xff] %v1612
        %1677 = vst [vmem:[%s200 + $0x30] sm:$0xff] %v1613
        %1678 = vst [vmem:[%s200 + $0x38] sm:$0xff] %v1614
        %1679 = vst [vmem:[%s200 + $0x40] sm:$0xff] %v1615
        %1680 = vst [vmem:[%s200 + $0x48] sm:$0xff] %v1616
        %1681 = vst [vmem:[%s200 + $0x50] sm:$0xff] %v1617
        %1682 = vst [vmem:[%s200 + $0x58] sm:$0xff] %v1618
        %1683 = vst [vmem:[%s200 + $0x60] sm:$0xff] %v1619
        %1684 = vst [vmem:[%s200 + $0x68] sm:$0xff] %v1620
        %1685 = vst [vmem:[%s200 + $0x70] sm:$0xff] %v1621
        %1686 = vst [vmem:[%s200 + $0x78] sm:$0xff] %v1622
        %1687 = vst [vmem:[%s200 + $0x80] sm:$0xff] %v1623
        %1688 = vst [vmem:[%s200 + $0x88] sm:$0xff] %v1624
        %1689 = vst [vmem:[%s200 + $0x90] sm:$0xff] %v1625
        %1690 = vst [vmem:[%s200 + $0x98] sm:$0xff] %v1626
        %1691 = vst [vmem:[%s200 + $0xa0] sm:$0xff] %v1627
        %1692 = vst [vmem:[%s200 + $0xa8] sm:$0xff] %v1628
        %1693 = vst [vmem:[%s200 + $0xb0] sm:$0xff] %v1629
        %1694 = vst [vmem:[%s200 + $0xb8] sm:$0xff] %v1630
        %1695 = vst [vmem:[%s200 + $0xc0] sm:$0xff] %v1631
        %1696 = vst [vmem:[%s200 + $0xc8] sm:$0xff] %v1632
        %1697 = vst [vmem:[%s200 + $0xd0] sm:$0xff] %v1633
        %1698 = vst [vmem:[%s200 + $0xd8] sm:$0xff] %v1634
        %1699 = vst [vmem:[%s200 + $0xe0] sm:$0xff] %v1635
        %1700 = vst [vmem:[%s200 + $0xe8] sm:$0xff] %v1636
        %1701 = vst [vmem:[%s200 + $0xf0] sm:$0xff] %v1637
        %1702 = vst [vmem:[%s200 + $0xf8] sm:$0xff] %v1638
        %1703 = vst [vmem:[%s200 + $0x100] sm:$0xff] %v1639
        %1704 = vst [vmem:[%s200 + $0x108] sm:$0xff] %v1640
        %1705 = vst [vmem:[%s200 + $0x110] sm:$0xff] %v1641
        %1706 = vst [vmem:[%s200 + $0x118] sm:$0xff] %v1642
        %1707 = vst [vmem:[%s200 + $0x120] sm:$0xff] %v1643
        %1708 = vst [vmem:[%s200 + $0x128] sm:$0xff] %v1644
        %1709 = vst [vmem:[%s200 + $0x130] sm:$0xff] %v1645
        %1710 = vst [vmem:[%s200 + $0x138] sm:$0xff] %v1646
        %1711 = vst [vmem:[%s200 + $0x140] sm:$0xff] %v1647
        %1712 = vst [vmem:[%s200 + $0x148] sm:$0xff] %v1648
        %1713 = vst [vmem:[%s200 + $0x150] sm:$0xff] %v1649
        %1714 = vst [vmem:[%s200 + $0x158] sm:$0xff] %v1650
        %1715 = vst [vmem:[%s200 + $0x160] sm:$0xff] %v1651
        %1716 = vst [vmem:[%s200 + $0x168] sm:$0xff] %v1652
        %1717 = vst [vmem:[%s200 + $0x170] sm:$0xff] %v1653
        %1718 = vst [vmem:[%s200 + $0x178] sm:$0xff] %v1654
        %1719 = vst [vmem:[%s200 + $0x180] sm:$0xff] %v1655
        %1720 = vst [vmem:[%s200 + $0x188] sm:$0xff] %v1656
        %1721 = vst [vmem:[%s200 + $0x190] sm:$0xff] %v1657
        %1722 = vst [vmem:[%s200 + $0x198] sm:$0xff] %v1658
        %1723 = vst [vmem:[%s200 + $0x1a0] sm:$0xff] %v1659
        %1724 = vst [vmem:[%s200 + $0x1a8] sm:$0xff] %v1660
        %1725 = vst [vmem:[%s200 + $0x1b0] sm:$0xff] %v1661
        %1726 = vst [vmem:[%s200 + $0x1b8] sm:$0xff] %v1662
        %1727 = vst [vmem:[%s200 + $0x1c0] sm:$0xff] %v1663
        %1728 = vst [vmem:[%s200 + $0x1c8] sm:$0xff] %v1664
        %1729 = vst [vmem:[%s200 + $0x1d0] sm:$0xff] %v1665
        %1730 = vst [vmem:[%s200 + $0x1d8] sm:$0xff] %v1666
        %1731 = vst [vmem:[%s200 + $0x1e0] sm:$0xff] %v1667
        %1732 = vst [vmem:[%s200 + $0x1e8] sm:$0xff] %v1668
        %1733 = vst [vmem:[%s200 + $0x1f0] sm:$0xff] %v1669
        %1734 = vst [vmem:[%s200 + $0x1f8] sm:$0xff] %v1670
        %s1735 = sand.u32 %s95, 1
        %s1736 = sand.u32 %s95, 1
        %s1737 = smul.addr %s1736, 512
        %s1738 = scalar_lea.vmem [#allocation2], %s1737
        // Predicated region
        $region33: #{segment_position_encoding.1} parent=31 // pred_check
          %p1739 = pneg %p105
        $region34: #{segment_position_encoding.1} parent=31 // pred_check_branch
          %1741 = sbr.rel (%p1739) target = $region36
        $region35: #{segment_position_encoding.1} parent=31 // pred_region
          %s1742 = smul.u32 64, %s14
          %s1743 = ssub.s32 120, %s1742
          %p1744 = scmp.lt.s32.totalorder %s1743, 64
          %s1745 = scalar_select %p1744, %s1743, 64
          %s1746 = smul.u32 128, %s1745
          %p1747 = scmp.ne.s32.totalorder 0, %s1746
          %s1748 = smul.addr %s1742, 8
          %s1749 = scalar_lea.vmem %s3, %s1748
          // Predicated region
          $region37: #{segment_position_encoding.1} parent=35 // pred_check
            %p1750 = pneg %p1747
          $region38: #{segment_position_encoding.1} parent=35 // pred_check_branch
            %1752 = sbr.rel (%p1750) target = $region40
          $region39: #{segment_position_encoding.1} parent=35 // pred_region
            // Predicated region
            $region41: #{segment_position_encoding.1} parent=39 // pred_check
              _
            $region42: #{segment_position_encoding.1} parent=39 // pred_check_branch
              %1754 = sbr.rel (0) target = $region44
            $region43: #{segment_position_encoding.1} parent=39 // pred_region
              // Predicated region
              $region63: #{segment_position_encoding.1} parent=43 // pred_check
                _
              $region64: #{segment_position_encoding.1} parent=43 // pred_check_branch
                %1929 = sbr.rel (0) target = $region66
              $region65: #{segment_position_encoding.1} parent=43 // pred_region
                %s1930 = sshrl.u32 %s1745, 6
                // While loop
                $region67: #{segment_position_encoding.1} parent=65 // loop_pre_header
                  _
                $region68: #{segment_position_encoding.1} parent=65 // loop_header
                  %s1932 = sphi 0, %s1934
                  %p1933 = scmp.ge.s32.totalorder %s1932, %s1930
                  %s1937 = sphi 0, %s2070
                  %s1938 = sphi %s1738, %s2073
                  %s1939 = sphi %s1749, %s2074
                $region69: #{segment_position_encoding.1} parent=65 // loop_header_branch
                  %1936 = sbr.rel (%p1933) target = $region73
                $region70: #{segment_position_encoding.1} parent=65 // loop_body
                  %v1940 = vld [vmem:[%s1938] sm:$0xff]
                  %1941 = vst [vmem:[%s1939] sm:$0xff] %v1940
                  %v1942 = vld [vmem:[%s1938 + $0x8] sm:$0xff]
                  %1943 = vst [vmem:[%s1939 + $0x8] sm:$0xff] %v1942
                  %v1944 = vld [vmem:[%s1938 + $0x10] sm:$0xff]
                  %1945 = vst [vmem:[%s1939 + $0x10] sm:$0xff] %v1944
                  %v1946 = vld [vmem:[%s1938 + $0x18] sm:$0xff]
                  %1947 = vst [vmem:[%s1939 + $0x18] sm:$0xff] %v1946
                  %v1948 = vld [vmem:[%s1938 + $0x20] sm:$0xff]
                  %1949 = vst [vmem:[%s1939 + $0x20] sm:$0xff] %v1948
                  %v1950 = vld [vmem:[%s1938 + $0x28] sm:$0xff]
                  %1951 = vst [vmem:[%s1939 + $0x28] sm:$0xff] %v1950
                  %v1952 = vld [vmem:[%s1938 + $0x30] sm:$0xff]
                  %1953 = vst [vmem:[%s1939 + $0x30] sm:$0xff] %v1952
                  %v1954 = vld [vmem:[%s1938 + $0x38] sm:$0xff]
                  %1955 = vst [vmem:[%s1939 + $0x38] sm:$0xff] %v1954
                  %v1956 = vld [vmem:[%s1938 + $0x40] sm:$0xff]
                  %1957 = vst [vmem:[%s1939 + $0x40] sm:$0xff] %v1956
                  %v1958 = vld [vmem:[%s1938 + $0x48] sm:$0xff]
                  %1959 = vst [vmem:[%s1939 + $0x48] sm:$0xff] %v1958
                  %v1960 = vld [vmem:[%s1938 + $0x50] sm:$0xff]
                  %1961 = vst [vmem:[%s1939 + $0x50] sm:$0xff] %v1960
                  %v1962 = vld [vmem:[%s1938 + $0x58] sm:$0xff]
                  %1963 = vst [vmem:[%s1939 + $0x58] sm:$0xff] %v1962
                  %v1964 = vld [vmem:[%s1938 + $0x60] sm:$0xff]
                  %1965 = vst [vmem:[%s1939 + $0x60] sm:$0xff] %v1964
                  %v1966 = vld [vmem:[%s1938 + $0x68] sm:$0xff]
                  %1967 = vst [vmem:[%s1939 + $0x68] sm:$0xff] %v1966
                  %v1968 = vld [vmem:[%s1938 + $0x70] sm:$0xff]
                  %1969 = vst [vmem:[%s1939 + $0x70] sm:$0xff] %v1968
                  %v1970 = vld [vmem:[%s1938 + $0x78] sm:$0xff]
                  %1971 = vst [vmem:[%s1939 + $0x78] sm:$0xff] %v1970
                  %v1972 = vld [vmem:[%s1938 + $0x80] sm:$0xff]
                  %1973 = vst [vmem:[%s1939 + $0x80] sm:$0xff] %v1972
                  %v1974 = vld [vmem:[%s1938 + $0x88] sm:$0xff]
                  %1975 = vst [vmem:[%s1939 + $0x88] sm:$0xff] %v1974
                  %v1976 = vld [vmem:[%s1938 + $0x90] sm:$0xff]
                  %1977 = vst [vmem:[%s1939 + $0x90] sm:$0xff] %v1976
                  %v1978 = vld [vmem:[%s1938 + $0x98] sm:$0xff]
                  %1979 = vst [vmem:[%s1939 + $0x98] sm:$0xff] %v1978
                  %v1980 = vld [vmem:[%s1938 + $0xa0] sm:$0xff]
                  %1981 = vst [vmem:[%s1939 + $0xa0] sm:$0xff] %v1980
                  %v1982 = vld [vmem:[%s1938 + $0xa8] sm:$0xff]
                  %1983 = vst [vmem:[%s1939 + $0xa8] sm:$0xff] %v1982
                  %v1984 = vld [vmem:[%s1938 + $0xb0] sm:$0xff]
                  %1985 = vst [vmem:[%s1939 + $0xb0] sm:$0xff] %v1984
                  %v1986 = vld [vmem:[%s1938 + $0xb8] sm:$0xff]
                  %1987 = vst [vmem:[%s1939 + $0xb8] sm:$0xff] %v1986
                  %v1988 = vld [vmem:[%s1938 + $0xc0] sm:$0xff]
                  %1989 = vst [vmem:[%s1939 + $0xc0] sm:$0xff] %v1988
                  %v1990 = vld [vmem:[%s1938 + $0xc8] sm:$0xff]
                  %1991 = vst [vmem:[%s1939 + $0xc8] sm:$0xff] %v1990
                  %v1992 = vld [vmem:[%s1938 + $0xd0] sm:$0xff]
                  %1993 = vst [vmem:[%s1939 + $0xd0] sm:$0xff] %v1992
                  %v1994 = vld [vmem:[%s1938 + $0xd8] sm:$0xff]
                  %1995 = vst [vmem:[%s1939 + $0xd8] sm:$0xff] %v1994
                  %v1996 = vld [vmem:[%s1938 + $0xe0] sm:$0xff]
                  %1997 = vst [vmem:[%s1939 + $0xe0] sm:$0xff] %v1996
                  %v1998 = vld [vmem:[%s1938 + $0xe8] sm:$0xff]
                  %1999 = vst [vmem:[%s1939 + $0xe8] sm:$0xff] %v1998
                  %v2000 = vld [vmem:[%s1938 + $0xf0] sm:$0xff]
                  %2001 = vst [vmem:[%s1939 + $0xf0] sm:$0xff] %v2000
                  %v2002 = vld [vmem:[%s1938 + $0xf8] sm:$0xff]
                  %2003 = vst [vmem:[%s1939 + $0xf8] sm:$0xff] %v2002
                  %v2004 = vld [vmem:[%s1938 + $0x100] sm:$0xff]
                  %2005 = vst [vmem:[%s1939 + $0x100] sm:$0xff] %v2004
                  %v2006 = vld [vmem:[%s1938 + $0x108] sm:$0xff]
                  %2007 = vst [vmem:[%s1939 + $0x108] sm:$0xff] %v2006
                  %v2008 = vld [vmem:[%s1938 + $0x110] sm:$0xff]
                  %2009 = vst [vmem:[%s1939 + $0x110] sm:$0xff] %v2008
                  %v2010 = vld [vmem:[%s1938 + $0x118] sm:$0xff]
                  %2011 = vst [vmem:[%s1939 + $0x118] sm:$0xff] %v2010
                  %v2012 = vld [vmem:[%s1938 + $0x120] sm:$0xff]
                  %2013 = vst [vmem:[%s1939 + $0x120] sm:$0xff] %v2012
                  %v2014 = vld [vmem:[%s1938 + $0x128] sm:$0xff]
                  %2015 = vst [vmem:[%s1939 + $0x128] sm:$0xff] %v2014
                  %v2016 = vld [vmem:[%s1938 + $0x130] sm:$0xff]
                  %2017 = vst [vmem:[%s1939 + $0x130] sm:$0xff] %v2016
                  %v2018 = vld [vmem:[%s1938 + $0x138] sm:$0xff]
                  %2019 = vst [vmem:[%s1939 + $0x138] sm:$0xff] %v2018
                  %v2020 = vld [vmem:[%s1938 + $0x140] sm:$0xff]
                  %2021 = vst [vmem:[%s1939 + $0x140] sm:$0xff] %v2020
                  %v2022 = vld [vmem:[%s1938 + $0x148] sm:$0xff]
                  %2023 = vst [vmem:[%s1939 + $0x148] sm:$0xff] %v2022
                  %v2024 = vld [vmem:[%s1938 + $0x150] sm:$0xff]
                  %2025 = vst [vmem:[%s1939 + $0x150] sm:$0xff] %v2024
                  %v2026 = vld [vmem:[%s1938 + $0x158] sm:$0xff]
                  %2027 = vst [vmem:[%s1939 + $0x158] sm:$0xff] %v2026
                  %v2028 = vld [vmem:[%s1938 + $0x160] sm:$0xff]
                  %2029 = vst [vmem:[%s1939 + $0x160] sm:$0xff] %v2028
                  %v2030 = vld [vmem:[%s1938 + $0x168] sm:$0xff]
                  %2031 = vst [vmem:[%s1939 + $0x168] sm:$0xff] %v2030
                  %v2032 = vld [vmem:[%s1938 + $0x170] sm:$0xff]
                  %2033 = vst [vmem:[%s1939 + $0x170] sm:$0xff] %v2032
                  %v2034 = vld [vmem:[%s1938 + $0x178] sm:$0xff]
                  %2035 = vst [vmem:[%s1939 + $0x178] sm:$0xff] %v2034
                  %v2036 = vld [vmem:[%s1938 + $0x180] sm:$0xff]
                  %2037 = vst [vmem:[%s1939 + $0x180] sm:$0xff] %v2036
                  %v2038 = vld [vmem:[%s1938 + $0x188] sm:$0xff]
                  %2039 = vst [vmem:[%s1939 + $0x188] sm:$0xff] %v2038
                  %v2040 = vld [vmem:[%s1938 + $0x190] sm:$0xff]
                  %2041 = vst [vmem:[%s1939 + $0x190] sm:$0xff] %v2040
                  %v2042 = vld [vmem:[%s1938 + $0x198] sm:$0xff]
                  %2043 = vst [vmem:[%s1939 + $0x198] sm:$0xff] %v2042
                  %v2044 = vld [vmem:[%s1938 + $0x1a0] sm:$0xff]
                  %2045 = vst [vmem:[%s1939 + $0x1a0] sm:$0xff] %v2044
                  %v2046 = vld [vmem:[%s1938 + $0x1a8] sm:$0xff]
                  %2047 = vst [vmem:[%s1939 + $0x1a8] sm:$0xff] %v2046
                  %v2048 = vld [vmem:[%s1938 + $0x1b0] sm:$0xff]
                  %2049 = vst [vmem:[%s1939 + $0x1b0] sm:$0xff] %v2048
                  %v2050 = vld [vmem:[%s1938 + $0x1b8] sm:$0xff]
                  %2051 = vst [vmem:[%s1939 + $0x1b8] sm:$0xff] %v2050
                  %v2052 = vld [vmem:[%s1938 + $0x1c0] sm:$0xff]
                  %2053 = vst [vmem:[%s1939 + $0x1c0] sm:$0xff] %v2052
                  %v2054 = vld [vmem:[%s1938 + $0x1c8] sm:$0xff]
                  %2055 = vst [vmem:[%s1939 + $0x1c8] sm:$0xff] %v2054
                  %v2056 = vld [vmem:[%s1938 + $0x1d0] sm:$0xff]
                  %2057 = vst [vmem:[%s1939 + $0x1d0] sm:$0xff] %v2056
                  %v2058 = vld [vmem:[%s1938 + $0x1d8] sm:$0xff]
                  %2059 = vst [vmem:[%s1939 + $0x1d8] sm:$0xff] %v2058
                  %v2060 = vld [vmem:[%s1938 + $0x1e0] sm:$0xff]
                  %2061 = vst [vmem:[%s1939 + $0x1e0] sm:$0xff] %v2060
                  %v2062 = vld [vmem:[%s1938 + $0x1e8] sm:$0xff]
                  %2063 = vst [vmem:[%s1939 + $0x1e8] sm:$0xff] %v2062
                  %v2064 = vld [vmem:[%s1938 + $0x1f0] sm:$0xff]
                  %2065 = vst [vmem:[%s1939 + $0x1f0] sm:$0xff] %v2064
                  %v2066 = vld [vmem:[%s1938 + $0x1f8] sm:$0xff]
                  %2067 = vst [vmem:[%s1939 + $0x1f8] sm:$0xff] %v2066
                  %s2068 = sadd.s32 1, %s1937
                  %p2069 = scmp.ge.s32.totalorder %s2068, %s1930
                  %s2070 = scalar_select %p2069, 0, %s2068
                  %s2071 = smul.u32 %s2070, 512
                  %s2072 = smul.u32 %s2070, 512
                  %s2073 = scalar_lea.vmem %s1738, %s2071 [#allocation2]
                  %s2074 = scalar_lea.vmem %s1749, %s2072
                $region71: #{segment_position_encoding.1} parent=65 // loop_footer
                  %s1934 = sadd.s32 %s1932, 1
                $region72: #{segment_position_encoding.1} parent=65 // loop_footer_branch
                  %1931 = sbr.rel target = $region68
                $region73: #{segment_position_encoding.1} parent=65 // loop_exit
                  _
                %s2075 = sshrl.u32 %s1745, 6
                %s2076 = sand.u32 %s1745, 63
                %s2077 = smul.u32 %s2075, 64
                %s2078 = smul.u32 8, %s2077
                %s2079 = scalar_lea.vmem %s1738, %s2078 [#allocation2]
                %s2080 = smul.u32 8, %s2077
                %s2081 = scalar_lea.vmem %s1749, %s2080
                // While loop
                $region74: #{segment_position_encoding.1} parent=65 // loop_pre_header
                  _
                $region75: #{segment_position_encoding.1} parent=65 // loop_header
                  %s2083 = sphi 0, %s2085
                  %p2084 = scmp.ge.s32.totalorder %s2083, %s2076
                  %s2088 = sphi 0, %s2095
                  %s2089 = sphi %s2079, %s2098
                  %s2090 = sphi %s2081, %s2099
                $region76: #{segment_position_encoding.1} parent=65 // loop_header_branch
                  %2087 = sbr.rel (%p2084) target = $region80
                $region77: #{segment_position_encoding.1} parent=65 // loop_body
                  %v2091 = vld [vmem:[%s2089] sm:$0xff]
                  %2092 = vst [vmem:[%s2090] sm:$0xff] %v2091
                  %s2093 = sadd.s32 1, %s2088
                  %p2094 = scmp.ge.s32.totalorder %s2093, %s2076
                  %s2095 = scalar_select %p2094, 0, %s2093
                  %s2096 = smul.u32 %s2095, 8
                  %s2097 = smul.u32 %s2095, 8
                  %s2098 = scalar_lea.vmem %s2079, %s2096 [#allocation2]
                  %s2099 = scalar_lea.vmem %s2081, %s2097
                $region78: #{segment_position_encoding.1} parent=65 // loop_footer
                  %s2085 = sadd.s32 %s2083, 1
                $region79: #{segment_position_encoding.1} parent=65 // loop_footer_branch
                  %2082 = sbr.rel target = $region75
                $region80: #{segment_position_encoding.1} parent=65 // loop_exit
                  _
              $region66: #{segment_position_encoding.1} parent=43 // pred_fallthru
                _
              // Predicated region
              $region81: #{segment_position_encoding.1} parent=43 // pred_check
                _
              $region82: #{segment_position_encoding.1} parent=43 // pred_check_branch
                %2101 = sbr.rel target = $region84
              $region83: #{segment_position_encoding.1} parent=43 // pred_region
                _
              $region84: #{segment_position_encoding.1} parent=43 // pred_fallthru
                _
            $region44: #{segment_position_encoding.1} parent=39 // pred_fallthru
              _
            // Predicated region
            $region45: #{segment_position_encoding.1} parent=39 // pred_check
              _
            $region46: #{segment_position_encoding.1} parent=39 // pred_check_branch
              %1756 = sbr.rel target = $region48
            $region47: #{segment_position_encoding.1} parent=39 // pred_region
              %s1758 = sshrl.u32 %s1745, 6
              // While loop
              $region49: #{segment_position_encoding.1} parent=47 // loop_pre_header
                _
              $region50: #{segment_position_encoding.1} parent=47 // loop_header
                %s1760 = sphi 0, %s1762
                %p1761 = scmp.ge.s32.totalorder %s1760, %s1758
                %s1765 = sphi 0, %s1898
                %s1766 = sphi %s1738, %s1901
                %s1767 = sphi %s1749, %s1902
              $region51: #{segment_position_encoding.1} parent=47 // loop_header_branch
                %1764 = sbr.rel (%p1761) target = $region55
              $region52: #{segment_position_encoding.1} parent=47 // loop_body
                %v1768 = vld [vmem:[%s1766] sm:$0xff]
                %1769 = vst [vmem:[%s1767] sm:$0xff] %v1768
                %v1770 = vld [vmem:[%s1766 + $0x8] sm:$0xff]
                %1771 = vst [vmem:[%s1767 + $0x8] sm:$0xff] %v1770
                %v1772 = vld [vmem:[%s1766 + $0x10] sm:$0xff]
                %1773 = vst [vmem:[%s1767 + $0x10] sm:$0xff] %v1772
                %v1774 = vld [vmem:[%s1766 + $0x18] sm:$0xff]
                %1775 = vst [vmem:[%s1767 + $0x18] sm:$0xff] %v1774
                %v1776 = vld [vmem:[%s1766 + $0x20] sm:$0xff]
                %1777 = vst [vmem:[%s1767 + $0x20] sm:$0xff] %v1776
                %v1778 = vld [vmem:[%s1766 + $0x28] sm:$0xff]
                %1779 = vst [vmem:[%s1767 + $0x28] sm:$0xff] %v1778
                %v1780 = vld [vmem:[%s1766 + $0x30] sm:$0xff]
                %1781 = vst [vmem:[%s1767 + $0x30] sm:$0xff] %v1780
                %v1782 = vld [vmem:[%s1766 + $0x38] sm:$0xff]
                %1783 = vst [vmem:[%s1767 + $0x38] sm:$0xff] %v1782
                %v1784 = vld [vmem:[%s1766 + $0x40] sm:$0xff]
                %1785 = vst [vmem:[%s1767 + $0x40] sm:$0xff] %v1784
                %v1786 = vld [vmem:[%s1766 + $0x48] sm:$0xff]
                %1787 = vst [vmem:[%s1767 + $0x48] sm:$0xff] %v1786
                %v1788 = vld [vmem:[%s1766 + $0x50] sm:$0xff]
                %1789 = vst [vmem:[%s1767 + $0x50] sm:$0xff] %v1788
                %v1790 = vld [vmem:[%s1766 + $0x58] sm:$0xff]
                %1791 = vst [vmem:[%s1767 + $0x58] sm:$0xff] %v1790
                %v1792 = vld [vmem:[%s1766 + $0x60] sm:$0xff]
                %1793 = vst [vmem:[%s1767 + $0x60] sm:$0xff] %v1792
                %v1794 = vld [vmem:[%s1766 + $0x68] sm:$0xff]
                %1795 = vst [vmem:[%s1767 + $0x68] sm:$0xff] %v1794
                %v1796 = vld [vmem:[%s1766 + $0x70] sm:$0xff]
                %1797 = vst [vmem:[%s1767 + $0x70] sm:$0xff] %v1796
                %v1798 = vld [vmem:[%s1766 + $0x78] sm:$0xff]
                %1799 = vst [vmem:[%s1767 + $0x78] sm:$0xff] %v1798
                %v1800 = vld [vmem:[%s1766 + $0x80] sm:$0xff]
                %1801 = vst [vmem:[%s1767 + $0x80] sm:$0xff] %v1800
                %v1802 = vld [vmem:[%s1766 + $0x88] sm:$0xff]
                %1803 = vst [vmem:[%s1767 + $0x88] sm:$0xff] %v1802
                %v1804 = vld [vmem:[%s1766 + $0x90] sm:$0xff]
                %1805 = vst [vmem:[%s1767 + $0x90] sm:$0xff] %v1804
                %v1806 = vld [vmem:[%s1766 + $0x98] sm:$0xff]
                %1807 = vst [vmem:[%s1767 + $0x98] sm:$0xff] %v1806
                %v1808 = vld [vmem:[%s1766 + $0xa0] sm:$0xff]
                %1809 = vst [vmem:[%s1767 + $0xa0] sm:$0xff] %v1808
                %v1810 = vld [vmem:[%s1766 + $0xa8] sm:$0xff]
                %1811 = vst [vmem:[%s1767 + $0xa8] sm:$0xff] %v1810
                %v1812 = vld [vmem:[%s1766 + $0xb0] sm:$0xff]
                %1813 = vst [vmem:[%s1767 + $0xb0] sm:$0xff] %v1812
                %v1814 = vld [vmem:[%s1766 + $0xb8] sm:$0xff]
                %1815 = vst [vmem:[%s1767 + $0xb8] sm:$0xff] %v1814
                %v1816 = vld [vmem:[%s1766 + $0xc0] sm:$0xff]
                %1817 = vst [vmem:[%s1767 + $0xc0] sm:$0xff] %v1816
                %v1818 = vld [vmem:[%s1766 + $0xc8] sm:$0xff]
                %1819 = vst [vmem:[%s1767 + $0xc8] sm:$0xff] %v1818
                %v1820 = vld [vmem:[%s1766 + $0xd0] sm:$0xff]
                %1821 = vst [vmem:[%s1767 + $0xd0] sm:$0xff] %v1820
                %v1822 = vld [vmem:[%s1766 + $0xd8] sm:$0xff]
                %1823 = vst [vmem:[%s1767 + $0xd8] sm:$0xff] %v1822
                %v1824 = vld [vmem:[%s1766 + $0xe0] sm:$0xff]
                %1825 = vst [vmem:[%s1767 + $0xe0] sm:$0xff] %v1824
                %v1826 = vld [vmem:[%s1766 + $0xe8] sm:$0xff]
                %1827 = vst [vmem:[%s1767 + $0xe8] sm:$0xff] %v1826
                %v1828 = vld [vmem:[%s1766 + $0xf0] sm:$0xff]
                %1829 = vst [vmem:[%s1767 + $0xf0] sm:$0xff] %v1828
                %v1830 = vld [vmem:[%s1766 + $0xf8] sm:$0xff]
                %1831 = vst [vmem:[%s1767 + $0xf8] sm:$0xff] %v1830
                %v1832 = vld [vmem:[%s1766 + $0x100] sm:$0xff]
                %1833 = vst [vmem:[%s1767 + $0x100] sm:$0xff] %v1832
                %v1834 = vld [vmem:[%s1766 + $0x108] sm:$0xff]
                %1835 = vst [vmem:[%s1767 + $0x108] sm:$0xff] %v1834
                %v1836 = vld [vmem:[%s1766 + $0x110] sm:$0xff]
                %1837 = vst [vmem:[%s1767 + $0x110] sm:$0xff] %v1836
                %v1838 = vld [vmem:[%s1766 + $0x118] sm:$0xff]
                %1839 = vst [vmem:[%s1767 + $0x118] sm:$0xff] %v1838
                %v1840 = vld [vmem:[%s1766 + $0x120] sm:$0xff]
                %1841 = vst [vmem:[%s1767 + $0x120] sm:$0xff] %v1840
                %v1842 = vld [vmem:[%s1766 + $0x128] sm:$0xff]
                %1843 = vst [vmem:[%s1767 + $0x128] sm:$0xff] %v1842
                %v1844 = vld [vmem:[%s1766 + $0x130] sm:$0xff]
                %1845 = vst [vmem:[%s1767 + $0x130] sm:$0xff] %v1844
                %v1846 = vld [vmem:[%s1766 + $0x138] sm:$0xff]
                %1847 = vst [vmem:[%s1767 + $0x138] sm:$0xff] %v1846
                %v1848 = vld [vmem:[%s1766 + $0x140] sm:$0xff]
                %1849 = vst [vmem:[%s1767 + $0x140] sm:$0xff] %v1848
                %v1850 = vld [vmem:[%s1766 + $0x148] sm:$0xff]
                %1851 = vst [vmem:[%s1767 + $0x148] sm:$0xff] %v1850
                %v1852 = vld [vmem:[%s1766 + $0x150] sm:$0xff]
                %1853 = vst [vmem:[%s1767 + $0x150] sm:$0xff] %v1852
                %v1854 = vld [vmem:[%s1766 + $0x158] sm:$0xff]
                %1855 = vst [vmem:[%s1767 + $0x158] sm:$0xff] %v1854
                %v1856 = vld [vmem:[%s1766 + $0x160] sm:$0xff]
                %1857 = vst [vmem:[%s1767 + $0x160] sm:$0xff] %v1856
                %v1858 = vld [vmem:[%s1766 + $0x168] sm:$0xff]
                %1859 = vst [vmem:[%s1767 + $0x168] sm:$0xff] %v1858
                %v1860 = vld [vmem:[%s1766 + $0x170] sm:$0xff]
                %1861 = vst [vmem:[%s1767 + $0x170] sm:$0xff] %v1860
                %v1862 = vld [vmem:[%s1766 + $0x178] sm:$0xff]
                %1863 = vst [vmem:[%s1767 + $0x178] sm:$0xff] %v1862
                %v1864 = vld [vmem:[%s1766 + $0x180] sm:$0xff]
                %1865 = vst [vmem:[%s1767 + $0x180] sm:$0xff] %v1864
                %v1866 = vld [vmem:[%s1766 + $0x188] sm:$0xff]
                %1867 = vst [vmem:[%s1767 + $0x188] sm:$0xff] %v1866
                %v1868 = vld [vmem:[%s1766 + $0x190] sm:$0xff]
                %1869 = vst [vmem:[%s1767 + $0x190] sm:$0xff] %v1868
                %v1870 = vld [vmem:[%s1766 + $0x198] sm:$0xff]
                %1871 = vst [vmem:[%s1767 + $0x198] sm:$0xff] %v1870
                %v1872 = vld [vmem:[%s1766 + $0x1a0] sm:$0xff]
                %1873 = vst [vmem:[%s1767 + $0x1a0] sm:$0xff] %v1872
                %v1874 = vld [vmem:[%s1766 + $0x1a8] sm:$0xff]
                %1875 = vst [vmem:[%s1767 + $0x1a8] sm:$0xff] %v1874
                %v1876 = vld [vmem:[%s1766 + $0x1b0] sm:$0xff]
                %1877 = vst [vmem:[%s1767 + $0x1b0] sm:$0xff] %v1876
                %v1878 = vld [vmem:[%s1766 + $0x1b8] sm:$0xff]
                %1879 = vst [vmem:[%s1767 + $0x1b8] sm:$0xff] %v1878
                %v1880 = vld [vmem:[%s1766 + $0x1c0] sm:$0xff]
                %1881 = vst [vmem:[%s1767 + $0x1c0] sm:$0xff] %v1880
                %v1882 = vld [vmem:[%s1766 + $0x1c8] sm:$0xff]
                %1883 = vst [vmem:[%s1767 + $0x1c8] sm:$0xff] %v1882
                %v1884 = vld [vmem:[%s1766 + $0x1d0] sm:$0xff]
                %1885 = vst [vmem:[%s1767 + $0x1d0] sm:$0xff] %v1884
                %v1886 = vld [vmem:[%s1766 + $0x1d8] sm:$0xff]
                %1887 = vst [vmem:[%s1767 + $0x1d8] sm:$0xff] %v1886
                %v1888 = vld [vmem:[%s1766 + $0x1e0] sm:$0xff]
                %1889 = vst [vmem:[%s1767 + $0x1e0] sm:$0xff] %v1888
                %v1890 = vld [vmem:[%s1766 + $0x1e8] sm:$0xff]
                %1891 = vst [vmem:[%s1767 + $0x1e8] sm:$0xff] %v1890
                %v1892 = vld [vmem:[%s1766 + $0x1f0] sm:$0xff]
                %1893 = vst [vmem:[%s1767 + $0x1f0] sm:$0xff] %v1892
                %v1894 = vld [vmem:[%s1766 + $0x1f8] sm:$0xff]
                %1895 = vst [vmem:[%s1767 + $0x1f8] sm:$0xff] %v1894
                %s1896 = sadd.s32 1, %s1765
                %p1897 = scmp.ge.s32.totalorder %s1896, %s1758
                %s1898 = scalar_select %p1897, 0, %s1896
                %s1899 = smul.u32 %s1898, 512
                %s1900 = smul.u32 %s1898, 512
                %s1901 = scalar_lea.vmem %s1738, %s1899 [#allocation2]
                %s1902 = scalar_lea.vmem %s1749, %s1900
              $region53: #{segment_position_encoding.1} parent=47 // loop_footer
                %s1762 = sadd.s32 %s1760, 1
              $region54: #{segment_position_encoding.1} parent=47 // loop_footer_branch
                %1759 = sbr.rel target = $region50
              $region55: #{segment_position_encoding.1} parent=47 // loop_exit
                _
              %s1903 = sshrl.u32 %s1745, 6
              %s1904 = sand.u32 %s1745, 63
              %s1905 = smul.u32 %s1903, 64
              %s1906 = smul.u32 8, %s1905
              %s1907 = scalar_lea.vmem %s1738, %s1906 [#allocation2]
              %s1908 = smul.u32 8, %s1905
              %s1909 = scalar_lea.vmem %s1749, %s1908
              // While loop
              $region56: #{segment_position_encoding.1} parent=47 // loop_pre_header
                _
              $region57: #{segment_position_encoding.1} parent=47 // loop_header
                %s1911 = sphi 0, %s1913
                %p1912 = scmp.ge.s32.totalorder %s1911, %s1904
                %s1916 = sphi 0, %s1923
                %s1917 = sphi %s1907, %s1926
                %s1918 = sphi %s1909, %s1927
              $region58: #{segment_position_encoding.1} parent=47 // loop_header_branch
                %1915 = sbr.rel (%p1912) target = $region62
              $region59: #{segment_position_encoding.1} parent=47 // loop_body
                %v1919 = vld [vmem:[%s1917] sm:$0xff]
                %1920 = vst [vmem:[%s1918] sm:$0xff] %v1919
                %s1921 = sadd.s32 1, %s1916
                %p1922 = scmp.ge.s32.totalorder %s1921, %s1904
                %s1923 = scalar_select %p1922, 0, %s1921
                %s1924 = smul.u32 %s1923, 8
                %s1925 = smul.u32 %s1923, 8
                %s1926 = scalar_lea.vmem %s1907, %s1924 [#allocation2]
                %s1927 = scalar_lea.vmem %s1909, %s1925
              $region60: #{segment_position_encoding.1} parent=47 // loop_footer
                %s1913 = sadd.s32 %s1911, 1
              $region61: #{segment_position_encoding.1} parent=47 // loop_footer_branch
                %1910 = sbr.rel target = $region57
              $region62: #{segment_position_encoding.1} parent=47 // loop_exit
                _
            $region48: #{segment_position_encoding.1} parent=39 // pred_fallthru
              _
          $region40: #{segment_position_encoding.1} parent=35 // pred_fallthru
            _
          %2102 = vnop
        $region36: #{segment_position_encoding.1} parent=31 // pred_fallthru
          _
      $region32: #{segment_position_encoding.1} parent=5 // pred_fallthru
        _
      %p2103 = scmp.le.s32.totalorder 2, %s9
      // Predicated region
      $region85: #{segment_position_encoding.1} parent=5 // pred_check
        %p2104 = pneg %p2103
      $region86: #{segment_position_encoding.1} parent=5 // pred_check_branch
        %2106 = sbr.rel (%p2104) target = $region88
      $region87: #{segment_position_encoding.1} parent=5 // pred_region
        %s2107 = ssub.s32 %s9, 2
        // Predicated region
        $region89: #{segment_position_encoding.1} parent=87 // pred_check
          %p2108 = pneg %p111
        $region90: #{segment_position_encoding.1} parent=87 // pred_check_branch
          %2110 = sbr.rel (%p2108) target = $region92
        $region91: #{segment_position_encoding.1} parent=87 // pred_region
          %s2111 = sand.u32 %s96, 1
          %s2112 = sand.u32 %s96, 1
          %s2113 = smul.addr %s2112, 512
          %s2114 = scalar_lea.vmem [#allocation2], %s2113
        $region92: #{segment_position_encoding.1} parent=87 // pred_fallthru
          _
      $region88: #{segment_position_encoding.1} parent=5 // pred_fallthru
        _
    $region6: #{segment_position_encoding.1} parent=1 // loop_footer
      %s13 = sadd.s32 1, %s9
    $region7: #{segment_position_encoding.1} parent=1 // loop_footer_branch
      %8 = sbr.rel target = $region3
    $region8: #{segment_position_encoding.1} parent=1 // loop_exit
      _

</llo_original>
